<compile_context>
chip_gen: v7x
topology: tpu7x:2x2x1
jax: 0.10.0
libtpu: 0.0.40
codegen_flags: <defaults>
</compile_context>

<pallas_src>
import functools

import jax
import jax.numpy as jnp
from jax.experimental import pallas as pl
from jax.experimental.pallas import tpu as pltpu

BN_EPS = 1e-5
LANE = 128      # vreg lane width
SUBLANE = 8     # vreg sublane count (f32)


def _round_up(x, m):
    return (x + m - 1) // m * m


def _pad2d(a, rows, cols):
    out = jnp.zeros((rows, cols), a.dtype)
    return out.at[: a.shape[0], : a.shape[1]].set(a)


def _tpu_budget():
    """(row_tile_target, vmem_limit_bytes) derived from queried VMEM capacity."""
    try:
        cap = int(pltpu.get_tpu_info().vmem_capacity_bytes)
    except Exception:  # pragma: no cover - conservative fallback
        cap = 64 * 1024 * 1024
    if cap >= 100 * 1024 * 1024:        # 128 MiB parts: v5e / v6e
        return 8192, 64 * 1024 * 1024
    return 4096, 40 * 1024 * 1024       # 64 MiB-per-TC parts: v7x


def _choose_row_tile(n_rows, k, target):
    """Row tile = multiple of k*8 so every tile holds whole groups and the
    per-tile group count (tile // k) satisfies the 8-sublane constraint."""
    align = k * SUBLANE
    tile = max(align, target // align * align)
    tile = min(tile, _round_up(n_rows, align))
    n_tiles = -(-n_rows // tile)        # cdiv
    return tile, n_tiles


# ----------------------------------------------------------------------------
# Pass 1: per-channel sum / sum-of-squares of conv1 output (BN1 batch stats).
# ----------------------------------------------------------------------------
def _bn1_stats_kernel(x_ref, w1_ref, b1_ref, sum_ref, sumsq_ref,
                      *, tile_rows, n_rows, tiles_per_core, masked):
    c = pl.program_id(0)                    # core-split axis ("parallel")
    t = pl.program_id(1)                    # row-tile axis   ("arbitrary")
    gi = c * tiles_per_core + t             # global row-tile index

    @pl.when(t == 0)
    def _init():
        sum_ref[...] = jnp.zeros_like(sum_ref)
        sumsq_ref[...] = jnp.zeros_like(sumsq_ref)

    # layer 1: 1x1 conv as a matmul (f32 operands, f32 MXU accumulate)
    y = jnp.dot(x_ref[...], w1_ref[...],
                preferred_element_type=jnp.float32) + b1_ref[...]

    def _accum(yv):
        sum_ref[...] += jnp.sum(yv, axis=0)[None, None, :]
        sumsq_ref[...] += jnp.sum(yv * yv, axis=0)[None, None, :]

    if masked:
        last = n_rows // tile_rows          # index of the single partial tile
        @pl.when(gi != last)
        def _full():
            _accum(y)

        @pl.when(gi == last)
        def _tail():
            rid = (jax.lax.broadcasted_iota(jnp.int32, y.shape, 0)
                   + gi * tile_rows)
            _accum(jnp.where(rid < n_rows, y, 0.0))
    else:
        _accum(y)


# ----------------------------------------------------------------------------
# Pass 2: conv1 -> BN1(apply)+ReLU -> conv2 ; accumulate BN2 stats ; per-group
# max over nsample of sign(gamma2)*z (BN2 affine + ReLU finished in JAX).
# ----------------------------------------------------------------------------
def _mlp_apply_kernel(x_ref, w1_ref, b1_ref, s1_ref, t1_ref, w2_ref, b2_ref,
                      sgn_ref, sum_ref, sumsq_ref, gmax_ref,
                      *, tile_rows, n_rows, k, tiles_per_core, masked):
    c = pl.program_id(0)
    t = pl.program_id(1)
    gi = c * tiles_per_core + t

    @pl.when(t == 0)
    def _init():
        sum_ref[...] = jnp.zeros_like(sum_ref)
        sumsq_ref[...] = jnp.zeros_like(sumsq_ref)

    # layer 1: 1x1 conv -> BN1 (precomputed batch scale/shift) -> ReLU
    y = jnp.dot(x_ref[...], w1_ref[...],
                preferred_element_type=jnp.float32) + b1_ref[...]
    h = jnp.maximum(y * s1_ref[...] + t1_ref[...], 0.0)

    # layer 2: 1x1 conv; BN2 / ReLU applied after batch stats are known
    z = jnp.dot(h, w2_ref[...], preferred_element_type=jnp.float32) + b2_ref[...]

    # BN2 batch statistics (mask only the single partial tail tile)
    # TODO(synk): E[z^2]-E[z]^2 can cancel for very large batches; switch to a
    # shifted / Welford-style per-tile combine if that becomes an issue.
    def _accum(zv):
        sum_ref[...] += jnp.sum(zv, axis=0)[None, None, :]
        sumsq_ref[...] += jnp.sum(zv * zv, axis=0)[None, None, :]

    if masked:
        last = n_rows // tile_rows
        @pl.when(gi != last)
        def _full():
            _accum(z)

        @pl.when(gi == last)
        def _tail():
            rid = (jax.lax.broadcasted_iota(jnp.int32, z.shape, 0)
                   + gi * tile_rows)
            _accum(jnp.where(rid < n_rows, z, 0.0))
    else:
        _accum(z)

    # per-group max over nsample of sign-adjusted activations.  BN2+ReLU is a
    # per-channel monotone (a>=0) / antitone (a<0) affine followed by ReLU, so
    # relu(a*max_k(sgn*z)*sgn + c) == max_k relu(a*z + c); the affine and the
    # sign flip-back run on the tiny [B*S, C2] result in JAX.
    zs = z * sgn_ref[...]
    # TODO(synk): for k not a multiple of 8 this reshape forces a relayout;
    # replace with a sublane-roll max tree if such shapes become common.
    zg = zs.reshape(tile_rows // k, k, zs.shape[-1])
    gmax_ref[...] = jnp.max(zg, axis=1)


def mlp_bn_relu_max(x_flat, params, n_groups, k):
    """[B*S*K, Cin] f32 -> [B*S, Cout_last] f32 (== (conv->BN->ReLU)x2 + max_K)."""
    (w1, b1, g1, be1), (w2, b2, g2, be2) = params
    n_rows, c0 = x_flat.shape
    c1, c2 = w1.shape[1], w2.shape[1]
    c1p, c2p = _round_up(c1, LANE), _round_up(c2, LANE)

    row_target, vmem_limit = _tpu_budget()
    tile, n_tiles = _choose_row_tile(n_rows, k, row_target)
    # Split the row-tile axis across TensorCores when it divides evenly:
    # ~2x on v7x (2 TCs/chip), harmless serial loop on single-core v5e/v6e.
    n_split = 2 if (n_tiles >= 2 and n_tiles % 2 == 0) else 1
    tpc = n_tiles // n_split
    tile_groups = tile // k                # multiple of 8 by construction
    groups_pad = n_tiles * tile_groups
    masked = (n_tiles * tile != n_rows)

    # Tiny resident tensors (weights / BN params): lane-pad to 128.
    w1p = _pad2d(w1, c0, c1p)
    w2p = _pad2d(w2, c1p, c2p)
    b1p = _pad2d(b1.reshape(1, -1), 1, c1p)
    b2p = _pad2d(b2.reshape(1, -1), 1, c2p)

    const = lambda shape: pl.BlockSpec(shape, lambda c, t: (0, 0))
    # x streams unpadded: last block dim == full array dim (legal), no HBM pad.
    row_spec = pl.BlockSpec((tile, c0), lambda c, t: (c * tpc + t, 0))
    acc1_spec = pl.BlockSpec((1, 1, c1p), lambda c, t: (c, 0, 0))
    acc2_spec = pl.BlockSpec((1, 1, c2p), lambda c, t: (c, 0, 0))
    gmax_spec = pl.BlockSpec((tile_groups, c2p), lambda c, t: (c * tpc + t, 0))
    cparams = pltpu.CompilerParams(
        dimension_semantics=("parallel", "arbitrary"),
        vmem_limit_bytes=vmem_limit)

    # ---- pass 1: BN1 batch statistics --------------------------------------
    sum1, sumsq1 = pl.pallas_call(
        functools.partial(_bn1_stats_kernel, tile_rows=tile, n_rows=n_rows,
                          tiles_per_core=tpc, masked=masked),
        grid=(n_split, tpc),
        in_specs=[row_spec, const((c0, c1p)), const((1, c1p))],
        out_specs=[acc1_spec, acc1_spec],
        out_shape=[jax.ShapeDtypeStruct((n_split, 1, c1p), jnp.float32)] * 2,
        compiler_params=cparams,
    )(x_flat, w1p, b1p)

    n = float(n_rows)
    s1 = jnp.sum(sum1, axis=0)[0, :c1]
    ss1 = jnp.sum(sumsq1, axis=0)[0, :c1]
    mu1 = s1 / n
    var1 = jnp.maximum(ss1 / n - mu1 * mu1, 0.0)   # biased var (BN train mode)
    scale1 = g1 * jax.lax.rsqrt(var1 + BN_EPS)
    shift1 = be1 - mu1 * scale1
    s1p = _pad2d(scale1.reshape(1, -1), 1, c1p)
    t1p = _pad2d(shift1.reshape(1, -1), 1, c1p)

    # sign(a2) == sign(gamma2) is known now; the kernel only needs one extremum.
    sgn2 = jnp.where(g2 >= 0.0, 1.0, -1.0).astype(jnp.float32)
    sgn2p = _pad2d(sgn2.reshape(1, -1), 1, c2p)

    # ---- pass 2: apply BN1+ReLU, conv2, BN2 stats, per-group signed max -----
    sum2, sumsq2, gmax = pl.pallas_call(
        functools.partial(_mlp_apply_kernel, tile_rows=tile, n_rows=n_rows,
                          k=k, tiles_per_core=tpc, masked=masked),
        grid=(n_split, tpc),
        in_specs=[row_spec, const((c0, c1p)), const((1, c1p)),
                  const((1, c1p)), const((1, c1p)),
                  const((c1p, c2p)), const((1, c2p)), const((1, c2p))],
        out_specs=[acc2_spec, acc2_spec, gmax_spec],
        out_shape=[jax.ShapeDtypeStruct((n_split, 1, c2p), jnp.float32),
                   jax.ShapeDtypeStruct((n_split, 1, c2p), jnp.float32),
                   jax.ShapeDtypeStruct((groups_pad, c2p), jnp.float32)],
        compiler_params=cparams,
    )(x_flat, w1p, b1p, s1p, t1p, w2p, b2p, sgn2p)

    # ---- tiny finalize in JAX: BN2 affine + ReLU on the selected extremum ---
    s2 = jnp.sum(sum2, axis=0)[0, :c2]
    ss2 = jnp.sum(sumsq2, axis=0)[0, :c2]
    mu2 = s2 / n
    var2 = jnp.maximum(ss2 / n - mu2 * mu2, 0.0)
    a2 = g2 * jax.lax.rsqrt(var2 + BN_EPS)
    shift2 = be2 - mu2 * a2
    zsel = sgn2 * gmax[:n_groups, :c2]        # == max_k z if a2>=0 else min_k z
    return jnp.maximum(a2 * zsel + shift2, 0.0)          # [n_groups, c2]


# ----------------------------------------------------------------------------
# Sampling / grouping glue (data-dependent gathers) in plain JAX.
# ----------------------------------------------------------------------------
def index_points(points, idx):
    # points: [B, N, C], idx: [B, ...] int -> [B, ..., C]
    return jax.vmap(lambda p, i: p[i])(points, idx)


def square_distance(src, dst):
    dist = -2.0 * jnp.matmul(src, jnp.swapaxes(dst, 1, 2))
    dist = dist + jnp.sum(src ** 2, -1)[..., None]
    dist = dist + jnp.sum(dst ** 2, -1)[:, None, :]
    return dist


def farthest_point_sample(xyz, npoint, key):
    B, N, _ = xyz.shape
    distance = jnp.full((B, N), 1e10, dtype=jnp.float32)
    farthest = jax.random.randint(key, (B,), 0, N, dtype=jnp.int32)
    batch_idx = jnp.arange(B, dtype=jnp.int32)
    centroids = jnp.zeros((B, npoint), dtype=jnp.int32)

    def body(i, carry):
        centroids, distance, farthest = carry
        centroids = centroids.at[:, i].set(farthest)
        centroid = xyz[batch_idx, farthest][:, None, :]          # [B,1,3]
        dist = jnp.sum((xyz - centroid) ** 2, -1)
        distance = jnp.minimum(distance, dist)
        farthest = jnp.argmax(distance, -1).astype(jnp.int32)
        return centroids, distance, farthest

    centroids, _, _ = jax.lax.fori_loop(0, npoint, body,
                                        (centroids, distance, farthest))
    return centroids


def query_ball_point(radius, nsample, xyz, new_xyz):
    B, N, _ = xyz.shape
    S = new_xyz.shape[1]
    sqrdists = square_distance(new_xyz, xyz)                      # [B, S, N]
    base = jnp.arange(N, dtype=jnp.int32)
    group_idx = jnp.where(sqrdists > radius ** 2, jnp.int32(N),
                          base[None, None, :])
    # nsample smallest indices, ascending (== sort(...)[..., :nsample], cheaper)
    group_idx = -jax.lax.top_k(-group_idx, nsample)[0]
    group_first = jnp.broadcast_to(group_idx[:, :, :1], (B, S, nsample))
    group_idx = jnp.where(group_idx == N, group_first, group_idx)
    return group_idx


def sample_and_group(npoint, radius, nsample, xyz, points, key):
    # TODO(synk): gather grouped rows inside the Pallas kernel via
    # scalar-prefetched group indices instead of materializing the K-times
    # amplified [B, S, K, C] tensor in HBM.
    B, N, C = xyz.shape
    fps_idx = farthest_point_sample(xyz, npoint, key)             # [B, S]
    new_xyz = index_points(xyz, fps_idx)                          # [B, S, 3]
    idx = query_ball_point(radius, nsample, xyz, new_xyz)         # [B, S, K]
    grouped_xyz = index_points(xyz, idx)                          # [B, S, K, 3]
    grouped_xyz_norm = grouped_xyz - new_xyz[:, :, None, :]
    grouped_points = index_points(points, idx)                    # [B, S, K, D]
    new_points = jnp.concatenate([grouped_xyz_norm, grouped_points], axis=-1)
    return new_xyz, new_points


# ----------------------------------------------------------------------------
# Full module forward (group_all=False branch).
# ----------------------------------------------------------------------------
@functools.partial(jax.jit, static_argnames=("npoint", "radius", "nsample"))
def pointnet_set_abstraction(xyz, points, params, fps_key,
                             npoint, radius, nsample):
    # xyz: [B, 3, N], points: [B, D, N]  (PyTorch channel-first convention)
    xyz_t = jnp.transpose(xyz, (0, 2, 1))        # [B, N, 3]
    points_t = jnp.transpose(points, (0, 2, 1))  # [B, N, D]

    new_xyz, new_points = sample_and_group(npoint, radius, nsample,
                                           xyz_t, points_t, fps_key)
    B, S, K, C0 = new_points.shape

    out = mlp_bn_relu_max(new_points.reshape(B * S * K, C0), params,
                          n_groups=B * S, k=K)                   # [B*S, Cout]
    cout = out.shape[-1]
    new_points_out = out.reshape(B, S, cout).transpose(0, 2, 1)  # [B, D', S]
    new_xyz_out = new_xyz.transpose(0, 2, 1)                     # [B, 3, S]
    return new_xyz_out, new_points_out


def init_params(key, in_channel, mlp):
    """Deterministic synthetic params.  Conv weights stored as [Cin, Cout]
    (transposed 1x1 conv kernels); BN gamma=1, beta=0 (PyTorch default init)."""
    params = []
    last = in_channel
    for cout in mlp:
        kw, kb, key = jax.random.split(key, 3)
        w = jax.random.normal(kw, (last, cout), dtype=jnp.float32) * 0.1
        b = jax.random.normal(kb, (cout,), dtype=jnp.float32) * 0.1
        g = jnp.ones((cout,), dtype=jnp.float32)
        be = jnp.zeros((cout,), dtype=jnp.float32)
        params.append((w, b, g, be))
        last = cout
    return tuple(params)


if __name__ == "__main__":
    key = jax.random.PRNGKey(0)
    k_xyz, k_pts, k_fps, k_par = jax.random.split(key, 4)

    # Small shapes consistent with the module's forward.
    B, N, D = 2, 32, 5
    npoint, radius, nsample = 8, 0.8, 8
    mlp = [16, 32]
    in_channel = D + 3  # grouped_xyz_norm (3) concat grouped point features (D)

    xyz = jax.random.normal(k_xyz, (B, 3, N), dtype=jnp.float32)
    points = jax.random.normal(k_pts, (B, D, N), dtype=jnp.float32)
    params = init_params(k_par, in_channel, mlp)

    new_xyz, new_points = pointnet_set_abstraction(
        xyz, points, params, k_fps,
        npoint=npoint, radius=radius, nsample=nsample)
    jax.block_until_ready((new_xyz, new_points))

    assert new_xyz.shape == (B, 3, npoint)
    assert new_points.shape == (B, mlp[-1], npoint)
    assert bool(jnp.all(jnp.isfinite(new_points)))
    print("KERNEL_OK")
</pallas_src>

<mosaic_0001>
module attributes {stable_mosaic.version = 11 : i64} {
  func.func @_bn1_stats_kernel(%arg0: i32, %arg1: i32, %arg2: memref<128x8xf32, #tpu.memory_space<vmem>>, %arg3: memref<8x128xf32, #tpu.memory_space<vmem>>, %arg4: memref<1x128xf32, #tpu.memory_space<vmem>>, %arg5: memref<1x1x128xf32, #tpu.memory_space<vmem>>, %arg6: memref<1x1x128xf32, #tpu.memory_space<vmem>>) attributes {dimension_semantics = [#tpu.dimension_semantics<parallel>, #tpu.dimension_semantics<arbitrary>], iteration_bounds = array<i64: 1, 1>, scalar_prefetch = 0 : i64, scratch_operands = 0 : i64, tpu.core_type = #tpu.core_type<tc>, window_params = [{transform_indices = @transform_0, window_bounds = array<i64: 128, 8>}, {pipeline_mode = #tpu.pipeline_mode<synchronous>, transform_indices = @transform_1, window_bounds = array<i64: 8, 128>}, {pipeline_mode = #tpu.pipeline_mode<synchronous>, transform_indices = @transform_2, window_bounds = array<i64: 1, 128>}, {transform_indices = @transform_3, window_bounds = array<i64: 1, 1, 128>}, {transform_indices = @transform_4, window_bounds = array<i64: 1, 1, 128>}]} {
    %c0_i32 = arith.constant 0 : i32
    %0 = arith.cmpi eq, %arg1, %c0_i32 : i32
    %1 = arith.extui %0 : i1 to i32
    %c0_i32_0 = arith.constant 0 : i32
    %2 = arith.cmpi ne, %1, %c0_i32_0 : i32
    scf.if %2 {
      %cst_20 = arith.constant 0.000000e+00 : f32
      %20 = vector.broadcast %cst_20 : f32 to vector<1x1x128xf32>
      %c0_21 = arith.constant 0 : index
      %c0_22 = arith.constant 0 : index
      %c0_23 = arith.constant 0 : index
      %21 = vector.load %arg5[%c0_21, %c0_22, %c0_23] : memref<1x1x128xf32, #tpu.memory_space<vmem>>, vector<1x1x128xf32>
      tpu.vector_store %arg5[%c0_21, %c0_22, %c0_23], %20 {strides = array<i32>} : memref<1x1x128xf32, #tpu.memory_space<vmem>>, vector<1x1x128xf32>,
      %cst_24 = arith.constant 0.000000e+00 : f32
      %22 = vector.broadcast %cst_24 : f32 to vector<1x1x128xf32>
      %c0_25 = arith.constant 0 : index
      %c0_26 = arith.constant 0 : index
      %c0_27 = arith.constant 0 : index
      %23 = vector.load %arg6[%c0_25, %c0_26, %c0_27] : memref<1x1x128xf32, #tpu.memory_space<vmem>>, vector<1x1x128xf32>
      tpu.vector_store %arg6[%c0_25, %c0_26, %c0_27], %22 {strides = array<i32>} : memref<1x1x128xf32, #tpu.memory_space<vmem>>, vector<1x1x128xf32>,
    } else {
    }
    %c0 = arith.constant 0 : index
    %c0_1 = arith.constant 0 : index
    %3 = vector.load %arg2[%c0, %c0_1] : memref<128x8xf32, #tpu.memory_space<vmem>>, vector<128x8xf32>
    %c0_2 = arith.constant 0 : index
    %c0_3 = arith.constant 0 : index
    %4 = vector.load %arg3[%c0_2, %c0_3] : memref<8x128xf32, #tpu.memory_space<vmem>>, vector<8x128xf32>
    %cst = arith.constant dense<0.000000e+00> : vector<128x128xf32>
    %5 = tpu.matmul %3, %4, %cst {dimension_numbers = #tpu.dot_dimension_numbers<[1], [0], [0], [1], [0, 0, 1, 1], [], []>} : vector<128x8xf32>, vector<8x128xf32>, vector<128x128xf32> -> vector<128x128xf32>
    %c0_4 = arith.constant 0 : index
    %c0_5 = arith.constant 0 : index
    %6 = vector.load %arg4[%c0_4, %c0_5] : memref<1x128xf32, #tpu.memory_space<vmem>>, vector<1x128xf32>
    %7 = vector.broadcast %6 : vector<1x128xf32> to vector<128x128xf32>
    %8 = arith.addf %5, %7 : vector<128x128xf32>
    %c0_6 = arith.constant 0 : index
    %c0_7 = arith.constant 0 : index
    %c0_8 = arith.constant 0 : index
    %9 = vector.load %arg5[%c0_6, %c0_7, %c0_8] : memref<1x1x128xf32, #tpu.memory_space<vmem>>, vector<1x1x128xf32>
    %cst_9 = arith.constant dense<0.000000e+00> : vector<128xf32>
    %10 = vector.multi_reduction <add>, %8, %cst_9 [0] : vector<128x128xf32> to vector<128xf32>
    %11 = vector.shape_cast %10 : vector<128xf32> to vector<1x1x128xf32>
    %12 = arith.addf %9, %11 : vector<1x1x128xf32>
    %c0_10 = arith.constant 0 : index
    %c0_11 = arith.constant 0 : index
    %c0_12 = arith.constant 0 : index
    %13 = vector.load %arg5[%c0_10, %c0_11, %c0_12] : memref<1x1x128xf32, #tpu.memory_space<vmem>>, vector<1x1x128xf32>
    tpu.vector_store %arg5[%c0_10, %c0_11, %c0_12], %12 {strides = array<i32>} : memref<1x1x128xf32, #tpu.memory_space<vmem>>, vector<1x1x128xf32>,
    %c0_13 = arith.constant 0 : index
    %c0_14 = arith.constant 0 : index
    %c0_15 = arith.constant 0 : index
    %14 = vector.load %arg6[%c0_13, %c0_14, %c0_15] : memref<1x1x128xf32, #tpu.memory_space<vmem>>, vector<1x1x128xf32>
    %15 = arith.mulf %8, %8 : vector<128x128xf32>
    %cst_16 = arith.constant dense<0.000000e+00> : vector<128xf32>
    %16 = vector.multi_reduction <add>, %15, %cst_16 [0] : vector<128x128xf32> to vector<128xf32>
    %17 = vector.shape_cast %16 : vector<128xf32> to vector<1x1x128xf32>
    %18 = arith.addf %14, %17 : vector<1x1x128xf32>
    %c0_17 = arith.constant 0 : index
    %c0_18 = arith.constant 0 : index
    %c0_19 = arith.constant 0 : index
    %19 = vector.load %arg6[%c0_17, %c0_18, %c0_19] : memref<1x1x128xf32, #tpu.memory_space<vmem>>, vector<1x1x128xf32>
    tpu.vector_store %arg6[%c0_17, %c0_18, %c0_19], %18 {strides = array<i32>} : memref<1x1x128xf32, #tpu.memory_space<vmem>>, vector<1x1x128xf32>,
    return
  }
  func.func @transform_0(%arg0: i32, %arg1: i32) -> (i32, i32) {
    %c1_i32 = arith.constant 1 : i32
    %0 = arith.muli %arg0, %c1_i32 : i32
    %1 = arith.addi %0, %arg1 : i32
    %c0_i32 = arith.constant 0 : i32
    %c0_i32_0 = arith.constant 0 : i32
    return %1, %c0_i32 : i32, i32
  }
  func.func @transform_1(%arg0: i32, %arg1: i32) -> (i32, i32) {
    %c0_i32 = arith.constant 0 : i32
    %c0_i32_0 = arith.constant 0 : i32
    %c0_i32_1 = arith.constant 0 : i32
    return %c0_i32, %c0_i32_0 : i32, i32
  }
  func.func @transform_2(%arg0: i32, %arg1: i32) -> (i32, i32) {
    %c0_i32 = arith.constant 0 : i32
    %c0_i32_0 = arith.constant 0 : i32
    %c0_i32_1 = arith.constant 0 : i32
    return %c0_i32, %c0_i32_0 : i32, i32
  }
  func.func @transform_3(%arg0: i32, %arg1: i32) -> (i32, i32, i32) {
    %c0_i32 = arith.constant 0 : i32
    %c0_i32_0 = arith.constant 0 : i32
    %c0_i32_1 = arith.constant 0 : i32
    return %arg0, %c0_i32, %c0_i32_0 : i32, i32, i32
  }
  func.func @transform_4(%arg0: i32, %arg1: i32) -> (i32, i32, i32) {
    %c0_i32 = arith.constant 0 : i32
    %c0_i32_0 = arith.constant 0 : i32
    %c0_i32_1 = arith.constant 0 : i32
    return %arg0, %c0_i32, %c0_i32_0 : i32, i32, i32
  }
}

module attributes {stable_mosaic.version = 11 : i64} {
  func.func @_mlp_apply_kernel(%arg0: i32, %arg1: i32, %arg2: memref<128x8xf32, #tpu.memory_space<vmem>>, %arg3: memref<8x128xf32, #tpu.memory_space<vmem>>, %arg4: memref<1x128xf32, #tpu.memory_space<vmem>>, %arg5: memref<1x128xf32, #tpu.memory_space<vmem>>, %arg6: memref<1x128xf32, #tpu.memory_space<vmem>>, %arg7: memref<128x128xf32, #tpu.memory_space<vmem>>, %arg8: memref<1x128xf32, #tpu.memory_space<vmem>>, %arg9: memref<1x128xf32, #tpu.memory_space<vmem>>, %arg10: memref<1x1x128xf32, #tpu.memory_space<vmem>>, %arg11: memref<1x1x128xf32, #tpu.memory_space<vmem>>, %arg12: memref<16x128xf32, #tpu.memory_space<vmem>>) attributes {dimension_semantics = [#tpu.dimension_semantics<parallel>, #tpu.dimension_semantics<arbitrary>], iteration_bounds = array<i64: 1, 1>, scalar_prefetch = 0 : i64, scratch_operands = 0 : i64, tpu.core_type = #tpu.core_type<tc>, window_params = [{transform_indices = @transform_0, window_bounds = array<i64: 128, 8>}, {pipeline_mode = #tpu.pipeline_mode<synchronous>, transform_indices = @transform_1, window_bounds = array<i64: 8, 128>}, {pipeline_mode = #tpu.pipeline_mode<synchronous>, transform_indices = @transform_2, window_bounds = array<i64: 1, 128>}, {pipeline_mode = #tpu.pipeline_mode<synchronous>, transform_indices = @transform_3, window_bounds = array<i64: 1, 128>}, {pipeline_mode = #tpu.pipeline_mode<synchronous>, transform_indices = @transform_4, window_bounds = array<i64: 1, 128>}, {pipeline_mode = #tpu.pipeline_mode<synchronous>, transform_indices = @transform_5, window_bounds = array<i64: 128, 128>}, {pipeline_mode = #tpu.pipeline_mode<synchronous>, transform_indices = @transform_6, window_bounds = array<i64: 1, 128>}, {pipeline_mode = #tpu.pipeline_mode<synchronous>, transform_indices = @transform_7, window_bounds = array<i64: 1, 128>}, {transform_indices = @transform_8, window_bounds = array<i64: 1, 1, 128>}, {transform_indices = @transform_9, window_bounds = array<i64: 1, 1, 128>}, {transform_indices = @transform_10, window_bounds = array<i64: 16, 128>}]} {
    %c0_i32 = arith.constant 0 : i32
    %0 = arith.cmpi eq, %arg1, %c0_i32 : i32
    %1 = arith.extui %0 : i1 to i32
    %c0_i32_0 = arith.constant 0 : i32
    %2 = arith.cmpi ne, %1, %c0_i32_0 : i32
    scf.if %2 {
      %cst_35 = arith.constant 0.000000e+00 : f32
      %39 = vector.broadcast %cst_35 : f32 to vector<1x1x128xf32>
      %c0_36 = arith.constant 0 : index
      %c0_37 = arith.constant 0 : index
      %c0_38 = arith.constant 0 : index
      %40 = vector.load %arg10[%c0_36, %c0_37, %c0_38] : memref<1x1x128xf32, #tpu.memory_space<vmem>>, vector<1x1x128xf32>
      tpu.vector_store %arg10[%c0_36, %c0_37, %c0_38], %39 {strides = array<i32>} : memref<1x1x128xf32, #tpu.memory_space<vmem>>, vector<1x1x128xf32>,
      %cst_39 = arith.constant 0.000000e+00 : f32
      %41 = vector.broadcast %cst_39 : f32 to vector<1x1x128xf32>
      %c0_40 = arith.constant 0 : index
      %c0_41 = arith.constant 0 : index
      %c0_42 = arith.constant 0 : index
      %42 = vector.load %arg11[%c0_40, %c0_41, %c0_42] : memref<1x1x128xf32, #tpu.memory_space<vmem>>, vector<1x1x128xf32>
      tpu.vector_store %arg11[%c0_40, %c0_41, %c0_42], %41 {strides = array<i32>} : memref<1x1x128xf32, #tpu.memory_space<vmem>>, vector<1x1x128xf32>,
    } else {
    }
    %c0 = arith.constant 0 : index
    %c0_1 = arith.constant 0 : index
    %3 = vector.load %arg2[%c0, %c0_1] : memref<128x8xf32, #tpu.memory_space<vmem>>, vector<128x8xf32>
    %c0_2 = arith.constant 0 : index
    %c0_3 = arith.constant 0 : index
    %4 = vector.load %arg3[%c0_2, %c0_3] : memref<8x128xf32, #tpu.memory_space<vmem>>, vector<8x128xf32>
    %cst = arith.constant dense<0.000000e+00> : vector<128x128xf32>
    %5 = tpu.matmul %3, %4, %cst {dimension_numbers = #tpu.dot_dimension_numbers<[1], [0], [0], [1], [0, 0, 1, 1], [], []>} : vector<128x8xf32>, vector<8x128xf32>, vector<128x128xf32> -> vector<128x128xf32>
    %c0_4 = arith.constant 0 : index
    %c0_5 = arith.constant 0 : index
    %6 = vector.load %arg4[%c0_4, %c0_5] : memref<1x128xf32, #tpu.memory_space<vmem>>, vector<1x128xf32>
    %7 = vector.broadcast %6 : vector<1x128xf32> to vector<128x128xf32>
    %8 = arith.addf %5, %7 : vector<128x128xf32>
    %c0_6 = arith.constant 0 : index
    %c0_7 = arith.constant 0 : index
    %9 = vector.load %arg5[%c0_6, %c0_7] : memref<1x128xf32, #tpu.memory_space<vmem>>, vector<1x128xf32>
    %10 = vector.broadcast %9 : vector<1x128xf32> to vector<128x128xf32>
    %11 = arith.mulf %8, %10 : vector<128x128xf32>
    %c0_8 = arith.constant 0 : index
    %c0_9 = arith.constant 0 : index
    %12 = vector.load %arg6[%c0_8, %c0_9] : memref<1x128xf32, #tpu.memory_space<vmem>>, vector<1x128xf32>
    %13 = vector.broadcast %12 : vector<1x128xf32> to vector<128x128xf32>
    %14 = arith.addf %11, %13 : vector<128x128xf32>
    %cst_10 = arith.constant 0.000000e+00 : f32
    %15 = vector.broadcast %cst_10 : f32 to vector<128x128xf32>
    %16 = arith.maximumf %14, %15 : vector<128x128xf32>
    %c0_11 = arith.constant 0 : index
    %c0_12 = arith.constant 0 : index
    %17 = vector.load %arg7[%c0_11, %c0_12] : memref<128x128xf32, #tpu.memory_space<vmem>>, vector<128x128xf32>
    %cst_13 = arith.constant dense<0.000000e+00> : vector<128x128xf32>
    %18 = tpu.matmul %16, %17, %cst_13 {dimension_numbers = #tpu.dot_dimension_numbers<[1], [0], [0], [1], [0, 0, 1, 1], [], []>} : vector<128x128xf32>, vector<128x128xf32>, vector<128x128xf32> -> vector<128x128xf32>
    %c0_14 = arith.constant 0 : index
    %c0_15 = arith.constant 0 : index
    %19 = vector.load %arg8[%c0_14, %c0_15] : memref<1x128xf32, #tpu.memory_space<vmem>>, vector<1x128xf32>
    %20 = vector.broadcast %19 : vector<1x128xf32> to vector<128x128xf32>
    %21 = arith.addf %18, %20 : vector<128x128xf32>
    %c0_16 = arith.constant 0 : index
    %c0_17 = arith.constant 0 : index
    %c0_18 = arith.constant 0 : index
    %22 = vector.load %arg10[%c0_16, %c0_17, %c0_18] : memref<1x1x128xf32, #tpu.memory_space<vmem>>, vector<1x1x128xf32>
    %cst_19 = arith.constant dense<0.000000e+00> : vector<128xf32>
    %23 = vector.multi_reduction <add>, %21, %cst_19 [0] : vector<128x128xf32> to vector<128xf32>
    %24 = vector.shape_cast %23 : vector<128xf32> to vector<1x1x128xf32>
    %25 = arith.addf %22, %24 : vector<1x1x128xf32>
    %c0_20 = arith.constant 0 : index
    %c0_21 = arith.constant 0 : index
    %c0_22 = arith.constant 0 : index
    %26 = vector.load %arg10[%c0_20, %c0_21, %c0_22] : memref<1x1x128xf32, #tpu.memory_space<vmem>>, vector<1x1x128xf32>
    tpu.vector_store %arg10[%c0_20, %c0_21, %c0_22], %25 {strides = array<i32>} : memref<1x1x128xf32, #tpu.memory_space<vmem>>, vector<1x1x128xf32>,
    %c0_23 = arith.constant 0 : index
    %c0_24 = arith.constant 0 : index
    %c0_25 = arith.constant 0 : index
    %27 = vector.load %arg11[%c0_23, %c0_24, %c0_25] : memref<1x1x128xf32, #tpu.memory_space<vmem>>, vector<1x1x128xf32>
    %28 = arith.mulf %21, %21 : vector<128x128xf32>
    %cst_26 = arith.constant dense<0.000000e+00> : vector<128xf32>
    %29 = vector.multi_reduction <add>, %28, %cst_26 [0] : vector<128x128xf32> to vector<128xf32>
    %30 = vector.shape_cast %29 : vector<128xf32> to vector<1x1x128xf32>
    %31 = arith.addf %27, %30 : vector<1x1x128xf32>
    %c0_27 = arith.constant 0 : index
    %c0_28 = arith.constant 0 : index
    %c0_29 = arith.constant 0 : index
    %32 = vector.load %arg11[%c0_27, %c0_28, %c0_29] : memref<1x1x128xf32, #tpu.memory_space<vmem>>, vector<1x1x128xf32>
    tpu.vector_store %arg11[%c0_27, %c0_28, %c0_29], %31 {strides = array<i32>} : memref<1x1x128xf32, #tpu.memory_space<vmem>>, vector<1x1x128xf32>,
    %c0_30 = arith.constant 0 : index
    %c0_31 = arith.constant 0 : index
    %33 = vector.load %arg9[%c0_30, %c0_31] : memref<1x128xf32, #tpu.memory_space<vmem>>, vector<1x128xf32>
    %34 = vector.broadcast %33 : vector<1x128xf32> to vector<128x128xf32>
    %35 = arith.mulf %21, %34 : vector<128x128xf32>
    %36 = vector.shape_cast %35 : vector<128x128xf32> to vector<16x8x128xf32>
    %cst_32 = arith.constant dense<0xFF800000> : vector<16x128xf32>
    %37 = vector.multi_reduction <maximumf>, %36, %cst_32 [1] : vector<16x8x128xf32> to vector<16x128xf32>
    %c0_33 = arith.constant 0 : index
    %c0_34 = arith.constant 0 : index
    %38 = vector.load %arg12[%c0_33, %c0_34] : memref<16x128xf32, #tpu.memory_space<vmem>>, vector<16x128xf32>
    tpu.vector_store %arg12[%c0_33, %c0_34], %37 {strides = array<i32>} : memref<16x128xf32, #tpu.memory_space<vmem>>, vector<16x128xf32>,
    return
  }
  func.func @transform_0(%arg0: i32, %arg1: i32) -> (i32, i32) {
    %c1_i32 = arith.constant 1 : i32
    %0 = arith.muli %arg0, %c1_i32 : i32
    %1 = arith.addi %0, %arg1 : i32
    %c0_i32 = arith.constant 0 : i32
    %c0_i32_0 = arith.constant 0 : i32
    return %1, %c0_i32 : i32, i32
  }
  func.func @transform_1(%arg0: i32, %arg1: i32) -> (i32, i32) {
    %c0_i32 = arith.constant 0 : i32
    %c0_i32_0 = arith.constant 0 : i32
    %c0_i32_1 = arith.constant 0 : i32
    return %c0_i32, %c0_i32_0 : i32, i32
  }
  func.func @transform_2(%arg0: i32, %arg1: i32) -> (i32, i32) {
    %c0_i32 = arith.constant 0 : i32
    %c0_i32_0 = arith.constant 0 : i32
    %c0_i32_1 = arith.constant 0 : i32
    return %c0_i32, %c0_i32_0 : i32, i32
  }
  func.func @transform_3(%arg0: i32, %arg1: i32) -> (i32, i32) {
    %c0_i32 = arith.constant 0 : i32
    %c0_i32_0 = arith.constant 0 : i32
    %c0_i32_1 = arith.constant 0 : i32
    return %c0_i32, %c0_i32_0 : i32, i32
  }
  func.func @transform_4(%arg0: i32, %arg1: i32) -> (i32, i32) {
    %c0_i32 = arith.constant 0 : i32
    %c0_i32_0 = arith.constant 0 : i32
    %c0_i32_1 = arith.constant 0 : i32
    return %c0_i32, %c0_i32_0 : i32, i32
  }
  func.func @transform_5(%arg0: i32, %arg1: i32) -> (i32, i32) {
    %c0_i32 = arith.constant 0 : i32
    %c0_i32_0 = arith.constant 0 : i32
    %c0_i32_1 = arith.constant 0 : i32
    return %c0_i32, %c0_i32_0 : i32, i32
  }
  func.func @transform_6(%arg0: i32, %arg1: i32) -> (i32, i32) {
    %c0_i32 = arith.constant 0 : i32
    %c0_i32_0 = arith.constant 0 : i32
    %c0_i32_1 = arith.constant 0 : i32
    return %c0_i32, %c0_i32_0 : i32, i32
  }
  func.func @transform_7(%arg0: i32, %arg1: i32) -> (i32, i32) {
    %c0_i32 = arith.constant 0 : i32
    %c0_i32_0 = arith.constant 0 : i32
    %c0_i32_1 = arith.constant 0 : i32
    return %c0_i32, %c0_i32_0 : i32, i32
  }
  func.func @transform_8(%arg0: i32, %arg1: i32) -> (i32, i32, i32) {
    %c0_i32 = arith.constant 0 : i32
    %c0_i32_0 = arith.constant 0 : i32
    %c0_i32_1 = arith.constant 0 : i32
    return %arg0, %c0_i32, %c0_i32_0 : i32, i32, i32
  }
  func.func @transform_9(%arg0: i32, %arg1: i32) -> (i32, i32, i32) {
    %c0_i32 = arith.constant 0 : i32
    %c0_i32_0 = arith.constant 0 : i32
    %c0_i32_1 = arith.constant 0 : i32
    return %arg0, %c0_i32, %c0_i32_0 : i32, i32, i32
  }
  func.func @transform_10(%arg0: i32, %arg1: i32) -> (i32, i32) {
    %c1_i32 = arith.constant 1 : i32
    %0 = arith.muli %arg0, %c1_i32 : i32
    %1 = arith.addi %0, %arg1 : i32
    %c0_i32 = arith.constant 0 : i32
    %c0_i32_0 = arith.constant 0 : i32
    return %1, %c0_i32 : i32, i32
  }
}

</mosaic_0001>

<llo_original>
// kernel: custom-call.8
$region0: #{custom-call.8}
  %s0 = inlined_call_operand.vmem [shape: f32[2,32], index: 0, kind: output, shape index: {}]

// kernel: pointnet_set_abstraction.2
$region0: #{pointnet_set_abstraction.2}
  #allocation0 [shape = 'u32[]', space=smem, size = 0x4, offset = 0x4, fixed_abs, tag = 'smem constant byte address 0x4 - core index']
  #allocation1 [shape = 'u32[144,128]{1,0:T(1,128)}', space=vmem, size = 0x12000, scoped, tag = 'internal scratch']
  %s0 = inlined_call_operand.vmem [shape: f32[128,8], index: 0, kind: input, shape index: {}]
  %s1 = inlined_call_operand.vmem [shape: f32[8,128], index: 1, kind: input, shape index: {}]
  %s2 = inlined_call_operand.vmem [shape: f32[1,128], index: 2, kind: input, shape index: {}]
  %s3 = inlined_call_operand.vmem [shape: f32[1,1,128], index: 3, kind: output, shape index: {0}]
  %s4 = inlined_call_operand.vmem [shape: f32[1,1,128], index: 4, kind: output, shape index: {1}]
  %5 = xla_tuple %s3, %s4
  %s6 = sld [smem:[#allocation0]]
  $region34: #{pointnet_set_abstraction.2} parent=0
    _
  %s8 = ssub.s32 1, %s6
  %s9 = scalar_select 0, %s8, %s6
  // Predicated region
  $region2: #{pointnet_set_abstraction.2} parent=0 // pred_check
    _
  $region3: #{pointnet_set_abstraction.2} parent=0 // pred_check_branch
    %11 = sbr.rel (0) target = $region5
  $region4: #{pointnet_set_abstraction.2} parent=0 // pred_region
    %s12 = sadd.s32 0, 0
    %s13 = smul.u32 16, %s12
    %p14 = scmp.lt.s32.totalorder %s13, 15
    %s15 = scalar_select %p14, %s13, 15
    %s16 = smul.addr %s15, 8
    %s17 = scalar_lea.vmem %s0, %s16
    %s18 = sadd.s32 0, 0
    %s19 = smul.u32 16, %s18
  $region5: #{pointnet_set_abstraction.2} parent=0 // pred_fallthru
    _
  // Predicated region
  $region6: #{pointnet_set_abstraction.2} parent=0 // pred_check
    _
  $region7: #{pointnet_set_abstraction.2} parent=0 // pred_check_branch
    %21 = sbr.rel (0) target = $region9
  $region8: #{pointnet_set_abstraction.2} parent=0 // pred_region
    _
  $region9: #{pointnet_set_abstraction.2} parent=0 // pred_fallthru
    _
  // Predicated region
  $region10: #{pointnet_set_abstraction.2} parent=0 // pred_check
    _
  $region11: #{pointnet_set_abstraction.2} parent=0 // pred_check_branch
    %23 = sbr.rel (0) target = $region13
  $region12: #{pointnet_set_abstraction.2} parent=0 // pred_region
    _
  $region13: #{pointnet_set_abstraction.2} parent=0 // pred_fallthru
    _
  %s24 = sadd.s32 0, 0
  %s25 = smul.u32 16, %s24
  %p26 = scmp.lt.s32.totalorder %s25, 15
  %s27 = scalar_select %p26, %s25, 15
  %s28 = smul.addr %s27, 8
  %s29 = scalar_lea.vmem %s0, %s28
  %s30 = sadd.s32 0, 0
  %s31 = smul.u32 16, %s30
  %p32 = scmp.lt.s32.totalorder %s31, 15
  %s33 = scalar_select %p32, %s31, 15
  %s34 = smul.addr %s33, 8
  %s35 = scalar_lea.vmem %s0, %s34
  %s36 = sadd.s32 0, 0
  %s37 = smul.u32 16, %s36
  %p38 = scmp.eq.s32.totalorder 0, 0
  // Predicated region
  $region14: #{pointnet_set_abstraction.2} parent=0 // pred_check
    %p39 = pneg %p38
  $region15: #{pointnet_set_abstraction.2} parent=0 // pred_check_branch
    %41 = sbr.rel (%p39) target = $region17
  $region16: #{pointnet_set_abstraction.2} parent=0 // pred_region
    %42 = vst [vmem:[%s3] sm:$0x1] 0.0
    %43 = vst [vmem:[%s4] sm:$0x1] 0.0
  $region17: #{pointnet_set_abstraction.2} parent=0 // pred_fallthru
    _
  %v44 = vld [vmem:[%s35] sm:$0xff]
  %v45 = vld [vmem:[%s35 + $0x8] sm:$0xff]
  %v46 = vld [vmem:[%s35 + $0x10] sm:$0xff]
  %v47 = vld [vmem:[%s35 + $0x18] sm:$0xff]
  %v48 = vld [vmem:[%s35 + $0x20] sm:$0xff]
  %v49 = vld [vmem:[%s35 + $0x28] sm:$0xff]
  %v50 = vld [vmem:[%s35 + $0x30] sm:$0xff]
  %v51 = vld [vmem:[%s35 + $0x38] sm:$0xff]
  %v52 = vld [vmem:[%s35 + $0x40] sm:$0xff]
  %v53 = vld [vmem:[%s35 + $0x48] sm:$0xff]
  %v54 = vld [vmem:[%s35 + $0x50] sm:$0xff]
  %v55 = vld [vmem:[%s35 + $0x58] sm:$0xff]
  %v56 = vld [vmem:[%s35 + $0x60] sm:$0xff]
  %v57 = vld [vmem:[%s35 + $0x68] sm:$0xff]
  %v58 = vld [vmem:[%s35 + $0x70] sm:$0xff]
  %v59 = vld [vmem:[%s35 + $0x78] sm:$0xff]
  %v60 = vld [vmem:[%s1] sm:$0xff]
  %v61 = vld [vmem:[%s2] sm:$0x1]
  %v63 = vlaneseq
  %v64 = vshrl.u32 %v63, 7
  %v65 = vsub.s32 0, %v64
  %v66 = vrot.slane %v61, %v65
  %vm68 = vcmask 64512
  %v70 = vsel %vm68, %v44, 0
  %v73 = vsel %vm68, %v45, 0
  %v76 = vsel %vm68, %v46, 0
  %v79 = vsel %vm68, %v47, 0
  %v82 = vsel %vm68, %v48, 0
  %v85 = vsel %vm68, %v49, 0
  %v88 = vsel %vm68, %v50, 0
  %v91 = vsel %vm68, %v51, 0
  %v94 = vsel %vm68, %v52, 0
  %v97 = vsel %vm68, %v53, 0
  %v100 = vsel %vm68, %v54, 0
  %v103 = vsel %vm68, %v55, 0
  %v106 = vsel %vm68, %v56, 0
  %v109 = vsel %vm68, %v57, 0
  %v112 = vsel %vm68, %v58, 0
  %v115 = vsel %vm68, %v59, 0
  %117 = vmatprep.subr.mxu0 0.0
  %118 = vmatpush1.msra.mxu0 %v60
  %119 = vmatprep.subr.mxu0 0.0
  %120 = vmatpush1.msra.mxu0 0.0
  %121 = vmatprep.subr.mxu0 0.0
  %122 = vmatpush1.msra.mxu0 0.0
  %123 = vmatprep.subr.mxu0 0.0
  %124 = vmatpush1.msra.mxu0 0.0
  %125 = vmatprep.subr.mxu0 0.0
  %126 = vmatpush1.msra.mxu0 0.0
  %127 = vmatprep.subr.mxu0 0.0
  %128 = vmatpush1.msra.mxu0 0.0
  %129 = vmatprep.subr.mxu0 0.0
  %130 = vmatpush1.msra.mxu0 0.0
  %131 = vmatprep.subr.mxu0 0.0
  %132 = vmatpush1.msra.mxu0 0.0
  %133 = vmatprep.subr.mxu0 0.0
  %134 = vmatpush1.msra.mxu0 0.0
  %135 = vmatprep.subr.mxu0 0.0
  %136 = vmatpush1.msra.mxu0 0.0
  %137 = vmatprep.subr.mxu0 0.0
  %138 = vmatpush1.msra.mxu0 0.0
  %139 = vmatprep.subr.mxu0 0.0
  %140 = vmatpush1.msra.mxu0 0.0
  %141 = vmatprep.subr.mxu0 0.0
  %142 = vmatpush1.msra.mxu0 0.0
  %143 = vmatprep.subr.mxu0 0.0
  %144 = vmatpush1.msra.mxu0 0.0
  %145 = vmatprep.subr.mxu0 0.0
  %146 = vmatpush1.msra.mxu0 0.0
  %147 = vmatprep.subr.mxu0 0.0
  %148 = vmatpush1.msra.mxu0 0.0
  %149 = vmatprep.subr.mxu0 0.0
  %150 = vmatpush1.msra.mxu0 0.0
  %151 = vmatprep.subr.mxu0 0.0
  %152 = vmatpush1.msra.mxu0 0.0
  %153 = vmatprep.subr.mxu0 0.0
  %154 = vmatpush1.msra.mxu0 0.0
  %155 = vmatprep.subr.mxu0 0.0
  %156 = vmatpush1.msra.mxu0 0.0
  %157 = vmatprep.subr.mxu0 0.0
  %158 = vmatpush1.msra.mxu0 0.0
  %159 = vmatprep.subr.mxu0 0.0
  %160 = vmatpush1.msra.mxu0 0.0
  %161 = vmatprep.subr.mxu0 0.0
  %162 = vmatpush1.msra.mxu0 0.0
  %163 = vmatprep.subr.mxu0 0.0
  %164 = vmatpush1.msra.mxu0 0.0
  %165 = vmatprep.subr.mxu0 0.0
  %166 = vmatpush1.msra.mxu0 0.0
  %167 = vmatprep.subr.mxu0 0.0
  %168 = vmatpush1.msra.mxu0 0.0
  %169 = vmatprep.subr.mxu0 0.0
  %170 = vmatpush1.msra.mxu0 0.0
  %171 = vmatprep.subr.mxu0 0.0
  %172 = vmatpush1.msra.mxu0 0.0
  %173 = vmatprep.subr.mxu0 0.0
  %174 = vmatpush1.msra.mxu0 0.0
  %175 = vmatprep.subr.mxu0 0.0
  %176 = vmatpush1.msra.mxu0 0.0
  %177 = vmatprep.subr.mxu0 0.0
  %178 = vmatpush1.msra.mxu0 0.0
  %179 = vmatprep.subr.mxu0 0.0
  %180 = vmatpush1.msra.mxu0 0.0
  %181 = vmatprep.mubr.f32.mxu0 0.0
  %182 = vmatmul.mubr.f32.gmra.mrb[0].mxu0 %v70
  %v183 = vpop.f32.mrb[0].mxu0
  %v184 = vadd.f32 %v66, %v183
  %v185 = vpop.f32.mrb[0].mxu0
  %186 = vmatprep.mubr.f32.mxu0 0.0
  %187 = vmatmul.mubr.f32.gmra.mrb[0].mxu0 %v73
  %v188 = vpop.f32.mrb[0].mxu0
  %v189 = vadd.f32 %v66, %v188
  %v190 = vpop.f32.mrb[0].mxu0
  %191 = vmatprep.mubr.f32.mxu0 0.0
  %192 = vmatmul.mubr.f32.gmra.mrb[0].mxu0 %v76
  %v193 = vpop.f32.mrb[0].mxu0
  %v194 = vadd.f32 %v66, %v193
  %v195 = vpop.f32.mrb[0].mxu0
  %196 = vmatprep.mubr.f32.mxu0 0.0
  %197 = vmatmul.mubr.f32.gmra.mrb[0].mxu0 %v79
  %v198 = vpop.f32.mrb[0].mxu0
  %v199 = vadd.f32 %v66, %v198
  %v200 = vpop.f32.mrb[0].mxu0
  %201 = vmatprep.mubr.f32.mxu0 0.0
  %202 = vmatmul.mubr.f32.gmra.mrb[0].mxu0 %v82
  %v203 = vpop.f32.mrb[0].mxu0
  %v204 = vadd.f32 %v66, %v203
  %v205 = vpop.f32.mrb[0].mxu0
  %206 = vmatprep.mubr.f32.mxu0 0.0
  %207 = vmatmul.mubr.f32.gmra.mrb[0].mxu0 %v85
  %v208 = vpop.f32.mrb[0].mxu0
  %v209 = vadd.f32 %v66, %v208
  %v210 = vpop.f32.mrb[0].mxu0
  %211 = vmatprep.mubr.f32.mxu0 0.0
  %212 = vmatmul.mubr.f32.gmra.mrb[0].mxu0 %v88
  %v213 = vpop.f32.mrb[0].mxu0
  %v214 = vadd.f32 %v66, %v213
  %v215 = vpop.f32.mrb[0].mxu0
  %216 = vmatprep.mubr.f32.mxu0 0.0
  %217 = vmatmul.mubr.f32.gmra.mrb[0].mxu0 %v91
  %v218 = vpop.f32.mrb[0].mxu0
  %v219 = vadd.f32 %v66, %v218
  %v220 = vpop.f32.mrb[0].mxu0
  %221 = vmatprep.mubr.f32.mxu0 0.0
  %222 = vmatmul.mubr.f32.gmra.mrb[0].mxu0 %v94
  %v223 = vpop.f32.mrb[0].mxu0
  %v224 = vadd.f32 %v66, %v223
  %v225 = vpop.f32.mrb[0].mxu0
  %226 = vmatprep.mubr.f32.mxu0 0.0
  %227 = vmatmul.mubr.f32.gmra.mrb[0].mxu0 %v97
  %v228 = vpop.f32.mrb[0].mxu0
  %v229 = vadd.f32 %v66, %v228
  %v230 = vpop.f32.mrb[0].mxu0
  %231 = vmatprep.mubr.f32.mxu0 0.0
  %232 = vmatmul.mubr.f32.gmra.mrb[0].mxu0 %v100
  %v233 = vpop.f32.mrb[0].mxu0
  %v234 = vadd.f32 %v66, %v233
  %v235 = vpop.f32.mrb[0].mxu0
  %236 = vmatprep.mubr.f32.mxu0 0.0
  %237 = vmatmul.mubr.f32.gmra.mrb[0].mxu0 %v103
  %v238 = vpop.f32.mrb[0].mxu0
  %v239 = vadd.f32 %v66, %v238
  %v240 = vpop.f32.mrb[0].mxu0
  %241 = vmatprep.mubr.f32.mxu0 0.0
  %242 = vmatmul.mubr.f32.gmra.mrb[0].mxu0 %v106
  %v243 = vpop.f32.mrb[0].mxu0
  %v244 = vadd.f32 %v66, %v243
  %v245 = vpop.f32.mrb[0].mxu0
  %246 = vmatprep.mubr.f32.mxu0 0.0
  %247 = vmatmul.mubr.f32.gmra.mrb[0].mxu0 %v109
  %v248 = vpop.f32.mrb[0].mxu0
  %v249 = vadd.f32 %v66, %v248
  %v250 = vpop.f32.mrb[0].mxu0
  %251 = vmatprep.mubr.f32.mxu0 0.0
  %252 = vmatmul.mubr.f32.gmra.mrb[0].mxu0 %v112
  %v253 = vpop.f32.mrb[0].mxu0
  %v254 = vadd.f32 %v66, %v253
  %v255 = vpop.f32.mrb[0].mxu0
  %256 = vmatprep.mubr.f32.mxu0 0.0
  %257 = vmatmul.mubr.f32.gmra.mrb[0].mxu0 %v115
  %v258 = vpop.f32.mrb[0].mxu0
  %v259 = vadd.f32 %v66, %v258
  %v260 = vpop.f32.mrb[0].mxu0
  %261 = vdwg.mxu0
  %v262 = vld [vmem:[%s3] sm:$0x1]
  %v263 = vadd.f32 %v184, %v189
  %v264 = vadd.f32 %v263, %v194
  %v265 = vadd.f32 %v264, %v199
  %v266 = vadd.f32 %v265, %v204
  %v267 = vadd.f32 %v266, %v209
  %v268 = vadd.f32 %v267, %v214
  %v269 = vadd.f32 %v268, %v219
  %v270 = vadd.f32 %v269, %v224
  %v271 = vadd.f32 %v270, %v229
  %v272 = vadd.f32 %v271, %v234
  %v273 = vadd.f32 %v272, %v239
  %v274 = vadd.f32 %v273, %v244
  %v275 = vadd.f32 %v274, %v249
  %v276 = vadd.f32 %v275, %v254
  %v277 = vadd.f32 %v276, %v259
  %v278 = vrot.slane %v277, 4
  %v279 = vadd.f32 %v277, %v278
  %v280 = vrot.slane %v279, 2
  %v281 = vadd.f32 %v279, %v280
  %v282 = vrot.slane %v281, 1
  %v283 = vadd.f32 %v281, %v282
  %v284 = vadd.f32 %v262, %v283
  %285 = vst [vmem:[%s3] sm:$0x1] %v284
  %v286 = vld [vmem:[%s4] sm:$0x1]
  %v287 = vmul.f32 %v184, %v184
  %v288 = vmul.f32 %v189, %v189
  %v289 = vmul.f32 %v194, %v194
  %v290 = vmul.f32 %v199, %v199
  %v291 = vmul.f32 %v204, %v204
  %v292 = vmul.f32 %v209, %v209
  %v293 = vmul.f32 %v214, %v214
  %v294 = vmul.f32 %v219, %v219
  %v295 = vmul.f32 %v224, %v224
  %v296 = vmul.f32 %v229, %v229
  %v297 = vmul.f32 %v234, %v234
  %v298 = vmul.f32 %v239, %v239
  %v299 = vmul.f32 %v244, %v244
  %v300 = vmul.f32 %v249, %v249
  %v301 = vmul.f32 %v254, %v254
  %v302 = vmul.f32 %v259, %v259
  %v303 = vadd.f32 %v287, %v288
  %v304 = vadd.f32 %v303, %v289
  %v305 = vadd.f32 %v304, %v290
  %v306 = vadd.f32 %v305, %v291
  %v307 = vadd.f32 %v306, %v292
  %v308 = vadd.f32 %v307, %v293
  %v309 = vadd.f32 %v308, %v294
  %v310 = vadd.f32 %v309, %v295
  %v311 = vadd.f32 %v310, %v296
  %v312 = vadd.f32 %v311, %v297
  %v313 = vadd.f32 %v312, %v298
  %v314 = vadd.f32 %v313, %v299
  %v315 = vadd.f32 %v314, %v300
  %v316 = vadd.f32 %v315, %v301
  %v317 = vadd.f32 %v316, %v302
  %v318 = vrot.slane %v317, 4
  %v319 = vadd.f32 %v317, %v318
  %v320 = vrot.slane %v319, 2
  %v321 = vadd.f32 %v319, %v320
  %v322 = vrot.slane %v321, 1
  %v323 = vadd.f32 %v321, %v322
  %v324 = vadd.f32 %v286, %v323
  %325 = vst [vmem:[%s4] sm:$0x1] %v324
  // Predicated region
  $region18: #{pointnet_set_abstraction.2} parent=0 // pred_check
    _
  $region19: #{pointnet_set_abstraction.2} parent=0 // pred_check_branch
    %327 = sbr.rel (0) target = $region21
  $region20: #{pointnet_set_abstraction.2} parent=0 // pred_region
    _
  $region21: #{pointnet_set_abstraction.2} parent=0 // pred_fallthru
    _
  // Predicated region
  $region22: #{pointnet_set_abstraction.2} parent=0 // pred_check
    _
  $region23: #{pointnet_set_abstraction.2} parent=0 // pred_check_branch
    %329 = sbr.rel (0) target = $region25
  $region24: #{pointnet_set_abstraction.2} parent=0 // pred_region
    _
  $region25: #{pointnet_set_abstraction.2} parent=0 // pred_fallthru
    _
  // Predicated region
  $region26: #{pointnet_set_abstraction.2} parent=0 // pred_check
    _
  $region27: #{pointnet_set_abstraction.2} parent=0 // pred_check_branch
    %331 = sbr.rel (0) target = $region29
  $region28: #{pointnet_set_abstraction.2} parent=0 // pred_region
    _
  $region29: #{pointnet_set_abstraction.2} parent=0 // pred_fallthru
    _
  // Predicated region
  $region30: #{pointnet_set_abstraction.2} parent=0 // pred_check
    _
  $region31: #{pointnet_set_abstraction.2} parent=0 // pred_check_branch
    %333 = sbr.rel (0) target = $region33
  $region32: #{pointnet_set_abstraction.2} parent=0 // pred_region
    _
  $region33: #{pointnet_set_abstraction.2} parent=0 // pred_fallthru
    _

// kernel: pointnet_set_abstraction.3
$region0: #{pointnet_set_abstraction.3}
  #allocation0 [shape = 'u32[]', space=smem, size = 0x4, offset = 0x4, fixed_abs, tag = 'smem constant byte address 0x4 - core index']
  #allocation1 [shape = 'u32[144,128]{1,0:T(1,128)}', space=vmem, size = 0x12000, scoped, tag = 'internal scratch']
  %s0 = inlined_call_operand.vmem [shape: f32[128,8], index: 0, kind: input, shape index: {}]
  %s1 = inlined_call_operand.vmem [shape: f32[8,128], index: 1, kind: input, shape index: {}]
  %s2 = inlined_call_operand.vmem [shape: f32[1,128], index: 2, kind: input, shape index: {}]
  %s3 = inlined_call_operand.vmem [shape: f32[1,128], index: 3, kind: input, shape index: {}]
  %s4 = inlined_call_operand.vmem [shape: f32[1,128], index: 4, kind: input, shape index: {}]
  %s5 = inlined_call_operand.vmem [shape: f32[128,128], index: 5, kind: input, shape index: {}]
  %s6 = inlined_call_operand.vmem [shape: f32[1,128], index: 6, kind: input, shape index: {}]
  %s7 = inlined_call_operand.vmem [shape: f32[1,128], index: 7, kind: input, shape index: {}]
  %s8 = inlined_call_operand.vmem [shape: f32[1,1,128], index: 8, kind: output, shape index: {0}]
  %s9 = inlined_call_operand.vmem [shape: f32[1,1,128], index: 9, kind: output, shape index: {1}]
  %s10 = inlined_call_operand.vmem [shape: f32[16,128], index: 10, kind: output, shape index: {2}]
  %11 = xla_tuple %s8, %s9, %s10
  %s12 = sld [smem:[#allocation0]]
  $region62: #{pointnet_set_abstraction.3} parent=0
    _
  %s14 = ssub.s32 1, %s12
  %s15 = scalar_select 0, %s14, %s12
  // Predicated region
  $region2: #{pointnet_set_abstraction.3} parent=0 // pred_check
    _
  $region3: #{pointnet_set_abstraction.3} parent=0 // pred_check_branch
    %17 = sbr.rel (0) target = $region5
  $region4: #{pointnet_set_abstraction.3} parent=0 // pred_region
    %s18 = sadd.s32 0, 0
    %s19 = smul.u32 16, %s18
    %p20 = scmp.lt.s32.totalorder %s19, 15
    %s21 = scalar_select %p20, %s19, 15
    %s22 = smul.addr %s21, 8
    %s23 = scalar_lea.vmem %s0, %s22
    %s24 = sadd.s32 0, 0
    %s25 = smul.u32 16, %s24
  $region5: #{pointnet_set_abstraction.3} parent=0 // pred_fallthru
    _
  // Predicated region
  $region6: #{pointnet_set_abstraction.3} parent=0 // pred_check
    _
  $region7: #{pointnet_set_abstraction.3} parent=0 // pred_check_branch
    %27 = sbr.rel (0) target = $region9
  $region8: #{pointnet_set_abstraction.3} parent=0 // pred_region
    _
  $region9: #{pointnet_set_abstraction.3} parent=0 // pred_fallthru
    _
  // Predicated region
  $region10: #{pointnet_set_abstraction.3} parent=0 // pred_check
    _
  $region11: #{pointnet_set_abstraction.3} parent=0 // pred_check_branch
    %29 = sbr.rel (0) target = $region13
  $region12: #{pointnet_set_abstraction.3} parent=0 // pred_region
    _
  $region13: #{pointnet_set_abstraction.3} parent=0 // pred_fallthru
    _
  // Predicated region
  $region14: #{pointnet_set_abstraction.3} parent=0 // pred_check
    _
  $region15: #{pointnet_set_abstraction.3} parent=0 // pred_check_branch
    %31 = sbr.rel (0) target = $region17
  $region16: #{pointnet_set_abstraction.3} parent=0 // pred_region
    _
  $region17: #{pointnet_set_abstraction.3} parent=0 // pred_fallthru
    _
  // Predicated region
  $region18: #{pointnet_set_abstraction.3} parent=0 // pred_check
    _
  $region19: #{pointnet_set_abstraction.3} parent=0 // pred_check_branch
    %33 = sbr.rel (0) target = $region21
  $region20: #{pointnet_set_abstraction.3} parent=0 // pred_region
    _
  $region21: #{pointnet_set_abstraction.3} parent=0 // pred_fallthru
    _
  // Predicated region
  $region22: #{pointnet_set_abstraction.3} parent=0 // pred_check
    _
  $region23: #{pointnet_set_abstraction.3} parent=0 // pred_check_branch
    %35 = sbr.rel (0) target = $region25
  $region24: #{pointnet_set_abstraction.3} parent=0 // pred_region
    _
  $region25: #{pointnet_set_abstraction.3} parent=0 // pred_fallthru
    _
  // Predicated region
  $region26: #{pointnet_set_abstraction.3} parent=0 // pred_check
    _
  $region27: #{pointnet_set_abstraction.3} parent=0 // pred_check_branch
    %37 = sbr.rel (0) target = $region29
  $region28: #{pointnet_set_abstraction.3} parent=0 // pred_region
    _
  $region29: #{pointnet_set_abstraction.3} parent=0 // pred_fallthru
    _
  // Predicated region
  $region30: #{pointnet_set_abstraction.3} parent=0 // pred_check
    _
  $region31: #{pointnet_set_abstraction.3} parent=0 // pred_check_branch
    %39 = sbr.rel (0) target = $region33
  $region32: #{pointnet_set_abstraction.3} parent=0 // pred_region
    _
  $region33: #{pointnet_set_abstraction.3} parent=0 // pred_fallthru
    _
  %s40 = sadd.s32 0, 0
  %s41 = smul.u32 16, %s40
  %p42 = scmp.lt.s32.totalorder %s41, 15
  %s43 = scalar_select %p42, %s41, 15
  %s44 = smul.addr %s43, 8
  %s45 = scalar_lea.vmem %s0, %s44
  %s46 = sadd.s32 0, 0
  %s47 = smul.u32 2, %s46
  %p48 = scmp.lt.s32.totalorder %s47, 1
  %s49 = scalar_select %p48, %s47, 1
  %s50 = smul.addr %s49, 8
  %s51 = scalar_lea.vmem %s10, %s50
  %s52 = sadd.s32 0, 0
  %s53 = smul.u32 16, %s52
  %p54 = scmp.lt.s32.totalorder %s53, 15
  %s55 = scalar_select %p54, %s53, 15
  %s56 = smul.addr %s55, 8
  %s57 = scalar_lea.vmem %s0, %s56
  %s58 = sadd.s32 0, 0
  %s59 = smul.u32 16, %s58
  %s60 = sadd.s32 0, 0
  %s61 = smul.u32 2, %s60
  %p62 = scmp.lt.s32.totalorder %s61, 1
  %s63 = scalar_select %p62, %s61, 1
  %s64 = smul.addr %s63, 8
  %s65 = scalar_lea.vmem %s10, %s64
  %s66 = sadd.s32 0, 0
  %s67 = smul.u32 2, %s66
  %p68 = scmp.eq.s32.totalorder 0, 0
  // Predicated region
  $region34: #{pointnet_set_abstraction.3} parent=0 // pred_check
    %p69 = pneg %p68
  $region35: #{pointnet_set_abstraction.3} parent=0 // pred_check_branch
    %71 = sbr.rel (%p69) target = $region37
  $region36: #{pointnet_set_abstraction.3} parent=0 // pred_region
    %72 = vst [vmem:[%s8] sm:$0x1] 0.0
    %73 = vst [vmem:[%s9] sm:$0x1] 0.0
  $region37: #{pointnet_set_abstraction.3} parent=0 // pred_fallthru
    _
  %v74 = vld [vmem:[%s57] sm:$0xff]
  %v75 = vld [vmem:[%s57 + $0x8] sm:$0xff]
  %v76 = vld [vmem:[%s57 + $0x10] sm:$0xff]
  %v77 = vld [vmem:[%s57 + $0x18] sm:$0xff]
  %v78 = vld [vmem:[%s57 + $0x20] sm:$0xff]
  %v79 = vld [vmem:[%s57 + $0x28] sm:$0xff]
  %v80 = vld [vmem:[%s57 + $0x30] sm:$0xff]
  %v81 = vld [vmem:[%s57 + $0x38] sm:$0xff]
  %v82 = vld [vmem:[%s57 + $0x40] sm:$0xff]
  %v83 = vld [vmem:[%s57 + $0x48] sm:$0xff]
  %v84 = vld [vmem:[%s57 + $0x50] sm:$0xff]
  %v85 = vld [vmem:[%s57 + $0x58] sm:$0xff]
  %v86 = vld [vmem:[%s57 + $0x60] sm:$0xff]
  %v87 = vld [vmem:[%s57 + $0x68] sm:$0xff]
  %v88 = vld [vmem:[%s57 + $0x70] sm:$0xff]
  %v89 = vld [vmem:[%s57 + $0x78] sm:$0xff]
  %v90 = vld [vmem:[%s1] sm:$0xff]
  %v91 = vld [vmem:[%s2] sm:$0x1]
  %v93 = vlaneseq
  %v94 = vshrl.u32 %v93, 7
  %v95 = vsub.s32 0, %v94
  %v96 = vrot.slane %v91, %v95
  %vm98 = vcmask 64512
  %v100 = vsel %vm98, %v74, 0
  %v103 = vsel %vm98, %v75, 0
  %v106 = vsel %vm98, %v76, 0
  %v109 = vsel %vm98, %v77, 0
  %v112 = vsel %vm98, %v78, 0
  %v115 = vsel %vm98, %v79, 0
  %v118 = vsel %vm98, %v80, 0
  %v121 = vsel %vm98, %v81, 0
  %v124 = vsel %vm98, %v82, 0
  %v127 = vsel %vm98, %v83, 0
  %v130 = vsel %vm98, %v84, 0
  %v133 = vsel %vm98, %v85, 0
  %v136 = vsel %vm98, %v86, 0
  %v139 = vsel %vm98, %v87, 0
  %v142 = vsel %vm98, %v88, 0
  %v145 = vsel %vm98, %v89, 0
  %147 = vmatprep.subr.mxu0 0.0
  %148 = vmatpush1.msra.mxu0 %v90
  %149 = vmatprep.subr.mxu0 0.0
  %150 = vmatpush1.msra.mxu0 0.0
  %151 = vmatprep.subr.mxu0 0.0
  %152 = vmatpush1.msra.mxu0 0.0
  %153 = vmatprep.subr.mxu0 0.0
  %154 = vmatpush1.msra.mxu0 0.0
  %155 = vmatprep.subr.mxu0 0.0
  %156 = vmatpush1.msra.mxu0 0.0
  %157 = vmatprep.subr.mxu0 0.0
  %158 = vmatpush1.msra.mxu0 0.0
  %159 = vmatprep.subr.mxu0 0.0
  %160 = vmatpush1.msra.mxu0 0.0
  %161 = vmatprep.subr.mxu0 0.0
  %162 = vmatpush1.msra.mxu0 0.0
  %163 = vmatprep.subr.mxu0 0.0
  %164 = vmatpush1.msra.mxu0 0.0
  %165 = vmatprep.subr.mxu0 0.0
  %166 = vmatpush1.msra.mxu0 0.0
  %167 = vmatprep.subr.mxu0 0.0
  %168 = vmatpush1.msra.mxu0 0.0
  %169 = vmatprep.subr.mxu0 0.0
  %170 = vmatpush1.msra.mxu0 0.0
  %171 = vmatprep.subr.mxu0 0.0
  %172 = vmatpush1.msra.mxu0 0.0
  %173 = vmatprep.subr.mxu0 0.0
  %174 = vmatpush1.msra.mxu0 0.0
  %175 = vmatprep.subr.mxu0 0.0
  %176 = vmatpush1.msra.mxu0 0.0
  %177 = vmatprep.subr.mxu0 0.0
  %178 = vmatpush1.msra.mxu0 0.0
  %179 = vmatprep.subr.mxu0 0.0
  %180 = vmatpush1.msra.mxu0 0.0
  %181 = vmatprep.subr.mxu0 0.0
  %182 = vmatpush1.msra.mxu0 0.0
  %183 = vmatprep.subr.mxu0 0.0
  %184 = vmatpush1.msra.mxu0 0.0
  %185 = vmatprep.subr.mxu0 0.0
  %186 = vmatpush1.msra.mxu0 0.0
  %187 = vmatprep.subr.mxu0 0.0
  %188 = vmatpush1.msra.mxu0 0.0
  %189 = vmatprep.subr.mxu0 0.0
  %190 = vmatpush1.msra.mxu0 0.0
  %191 = vmatprep.subr.mxu0 0.0
  %192 = vmatpush1.msra.mxu0 0.0
  %193 = vmatprep.subr.mxu0 0.0
  %194 = vmatpush1.msra.mxu0 0.0
  %195 = vmatprep.subr.mxu0 0.0
  %196 = vmatpush1.msra.mxu0 0.0
  %197 = vmatprep.subr.mxu0 0.0
  %198 = vmatpush1.msra.mxu0 0.0
  %199 = vmatprep.subr.mxu0 0.0
  %200 = vmatpush1.msra.mxu0 0.0
  %201 = vmatprep.subr.mxu0 0.0
  %202 = vmatpush1.msra.mxu0 0.0
  %203 = vmatprep.subr.mxu0 0.0
  %204 = vmatpush1.msra.mxu0 0.0
  %205 = vmatprep.subr.mxu0 0.0
  %206 = vmatpush1.msra.mxu0 0.0
  %207 = vmatprep.subr.mxu0 0.0
  %208 = vmatpush1.msra.mxu0 0.0
  %209 = vmatprep.subr.mxu0 0.0
  %210 = vmatpush1.msra.mxu0 0.0
  %211 = vmatprep.mubr.f32.mxu0 0.0
  %212 = vmatmul.mubr.f32.gmra.mrb[0].mxu0 %v100
  %v213 = vpop.f32.mrb[0].mxu0
  %v214 = vadd.f32 %v96, %v213
  %v215 = vpop.f32.mrb[0].mxu0
  %216 = vmatprep.mubr.f32.mxu0 0.0
  %217 = vmatmul.mubr.f32.gmra.mrb[0].mxu0 %v103
  %v218 = vpop.f32.mrb[0].mxu0
  %v219 = vadd.f32 %v96, %v218
  %v220 = vpop.f32.mrb[0].mxu0
  %221 = vmatprep.mubr.f32.mxu0 0.0
  %222 = vmatmul.mubr.f32.gmra.mrb[0].mxu0 %v106
  %v223 = vpop.f32.mrb[0].mxu0
  %v224 = vadd.f32 %v96, %v223
  %v225 = vpop.f32.mrb[0].mxu0
  %226 = vmatprep.mubr.f32.mxu0 0.0
  %227 = vmatmul.mubr.f32.gmra.mrb[0].mxu0 %v109
  %v228 = vpop.f32.mrb[0].mxu0
  %v229 = vadd.f32 %v96, %v228
  %v230 = vpop.f32.mrb[0].mxu0
  %231 = vmatprep.mubr.f32.mxu0 0.0
  %232 = vmatmul.mubr.f32.gmra.mrb[0].mxu0 %v112
  %v233 = vpop.f32.mrb[0].mxu0
  %v234 = vadd.f32 %v96, %v233
  %v235 = vpop.f32.mrb[0].mxu0
  %236 = vmatprep.mubr.f32.mxu0 0.0
  %237 = vmatmul.mubr.f32.gmra.mrb[0].mxu0 %v115
  %v238 = vpop.f32.mrb[0].mxu0
  %v239 = vadd.f32 %v96, %v238
  %v240 = vpop.f32.mrb[0].mxu0
  %241 = vmatprep.mubr.f32.mxu0 0.0
  %242 = vmatmul.mubr.f32.gmra.mrb[0].mxu0 %v118
  %v243 = vpop.f32.mrb[0].mxu0
  %v244 = vadd.f32 %v96, %v243
  %v245 = vpop.f32.mrb[0].mxu0
  %246 = vmatprep.mubr.f32.mxu0 0.0
  %247 = vmatmul.mubr.f32.gmra.mrb[0].mxu0 %v121
  %v248 = vpop.f32.mrb[0].mxu0
  %v249 = vadd.f32 %v96, %v248
  %v250 = vpop.f32.mrb[0].mxu0
  %251 = vmatprep.mubr.f32.mxu0 0.0
  %252 = vmatmul.mubr.f32.gmra.mrb[0].mxu0 %v124
  %v253 = vpop.f32.mrb[0].mxu0
  %v254 = vadd.f32 %v96, %v253
  %v255 = vpop.f32.mrb[0].mxu0
  %256 = vmatprep.mubr.f32.mxu0 0.0
  %257 = vmatmul.mubr.f32.gmra.mrb[0].mxu0 %v127
  %v258 = vpop.f32.mrb[0].mxu0
  %v259 = vadd.f32 %v96, %v258
  %v260 = vpop.f32.mrb[0].mxu0
  %261 = vmatprep.mubr.f32.mxu0 0.0
  %262 = vmatmul.mubr.f32.gmra.mrb[0].mxu0 %v130
  %v263 = vpop.f32.mrb[0].mxu0
  %v264 = vadd.f32 %v96, %v263
  %v265 = vpop.f32.mrb[0].mxu0
  %266 = vmatprep.mubr.f32.mxu0 0.0
  %267 = vmatmul.mubr.f32.gmra.mrb[0].mxu0 %v133
  %v268 = vpop.f32.mrb[0].mxu0
  %v269 = vadd.f32 %v96, %v268
  %v270 = vpop.f32.mrb[0].mxu0
  %271 = vmatprep.mubr.f32.mxu0 0.0
  %272 = vmatmul.mubr.f32.gmra.mrb[0].mxu0 %v136
  %v273 = vpop.f32.mrb[0].mxu0
  %v274 = vadd.f32 %v96, %v273
  %v275 = vpop.f32.mrb[0].mxu0
  %276 = vmatprep.mubr.f32.mxu0 0.0
  %277 = vmatmul.mubr.f32.gmra.mrb[0].mxu0 %v139
  %v278 = vpop.f32.mrb[0].mxu0
  %v279 = vadd.f32 %v96, %v278
  %v280 = vpop.f32.mrb[0].mxu0
  %281 = vmatprep.mubr.f32.mxu0 0.0
  %282 = vmatmul.mubr.f32.gmra.mrb[0].mxu0 %v142
  %v283 = vpop.f32.mrb[0].mxu0
  %v284 = vadd.f32 %v96, %v283
  %v285 = vpop.f32.mrb[0].mxu0
  %286 = vmatprep.mubr.f32.mxu0 0.0
  %287 = vmatmul.mubr.f32.gmra.mrb[0].mxu0 %v145
  %v288 = vpop.f32.mrb[0].mxu0
  %v289 = vadd.f32 %v96, %v288
  %v290 = vpop.f32.mrb[0].mxu0
  %291 = vdwg.mxu0
  %v292 = vld [vmem:[%s3] sm:$0x1]
  %v294 = vlaneseq
  %v295 = vshrl.u32 %v294, 7
  %v296 = vsub.s32 0, %v295
  %v297 = vrot.slane %v292, %v296
  %v299 = vmul.f32 %v214, %v297
  %v300 = vmul.f32 %v219, %v297
  %v301 = vmul.f32 %v224, %v297
  %v302 = vmul.f32 %v229, %v297
  %v303 = vmul.f32 %v234, %v297
  %v304 = vmul.f32 %v239, %v297
  %v305 = vmul.f32 %v244, %v297
  %v306 = vmul.f32 %v249, %v297
  %v307 = vmul.f32 %v254, %v297
  %v308 = vmul.f32 %v259, %v297
  %v309 = vmul.f32 %v264, %v297
  %v310 = vmul.f32 %v269, %v297
  %v311 = vmul.f32 %v274, %v297
  %v312 = vmul.f32 %v279, %v297
  %v313 = vmul.f32 %v284, %v297
  %v314 = vmul.f32 %v289, %v297
  %v315 = vld [vmem:[%s4] sm:$0x1]
  %v317 = vlaneseq
  %v318 = vshrl.u32 %v317, 7
  %v319 = vsub.s32 0, %v318
  %v320 = vrot.slane %v315, %v319
  %v322 = vadd.f32 %v299, %v320
  %v323 = vadd.f32 %v300, %v320
  %v324 = vadd.f32 %v301, %v320
  %v325 = vadd.f32 %v302, %v320
  %v326 = vadd.f32 %v303, %v320
  %v327 = vadd.f32 %v304, %v320
  %v328 = vadd.f32 %v305, %v320
  %v329 = vadd.f32 %v306, %v320
  %v330 = vadd.f32 %v307, %v320
  %v331 = vadd.f32 %v308, %v320
  %v332 = vadd.f32 %v309, %v320
  %v333 = vadd.f32 %v310, %v320
  %v334 = vadd.f32 %v311, %v320
  %v335 = vadd.f32 %v312, %v320
  %v336 = vadd.f32 %v313, %v320
  %v337 = vadd.f32 %v314, %v320
  %v338 = vmax.f32 %v322, 0.0
  %v339 = vmax.f32 %v323, 0.0
  %v340 = vmax.f32 %v324, 0.0
  %v341 = vmax.f32 %v325, 0.0
  %v342 = vmax.f32 %v326, 0.0
  %v343 = vmax.f32 %v327, 0.0
  %v344 = vmax.f32 %v328, 0.0
  %v345 = vmax.f32 %v329, 0.0
  %v346 = vmax.f32 %v330, 0.0
  %v347 = vmax.f32 %v331, 0.0
  %v348 = vmax.f32 %v332, 0.0
  %v349 = vmax.f32 %v333, 0.0
  %v350 = vmax.f32 %v334, 0.0
  %v351 = vmax.f32 %v335, 0.0
  %v352 = vmax.f32 %v336, 0.0
  %v353 = vmax.f32 %v337, 0.0
  %v354 = vld [vmem:[%s5] sm:$0xff]
  %v355 = vld [vmem:[%s5 + $0x8] sm:$0xff]
  %v356 = vld [vmem:[%s5 + $0x10] sm:$0xff]
  %v357 = vld [vmem:[%s5 + $0x18] sm:$0xff]
  %v358 = vld [vmem:[%s5 + $0x20] sm:$0xff]
  %v359 = vld [vmem:[%s5 + $0x28] sm:$0xff]
  %v360 = vld [vmem:[%s5 + $0x30] sm:$0xff]
  %v361 = vld [vmem:[%s5 + $0x38] sm:$0xff]
  %v362 = vld [vmem:[%s5 + $0x40] sm:$0xff]
  %v363 = vld [vmem:[%s5 + $0x48] sm:$0xff]
  %v364 = vld [vmem:[%s5 + $0x50] sm:$0xff]
  %v365 = vld [vmem:[%s5 + $0x58] sm:$0xff]
  %v366 = vld [vmem:[%s5 + $0x60] sm:$0xff]
  %v367 = vld [vmem:[%s5 + $0x68] sm:$0xff]
  %v368 = vld [vmem:[%s5 + $0x70] sm:$0xff]
  %v369 = vld [vmem:[%s5 + $0x78] sm:$0xff]
  %v370 = vld [vmem:[%s6] sm:$0x1]
  %v372 = vlaneseq
  %v373 = vshrl.u32 %v372, 7
  %v374 = vsub.s32 0, %v373
  %v375 = vrot.slane %v370, %v374
  %377 = vmatprep.subr.mxu0 0.0
  %378 = vmatpush1.msra.mxu0 %v354
  %379 = vmatprep.subr.mxu0 0.0
  %380 = vmatpush1.msra.mxu0 %v355
  %381 = vmatprep.subr.mxu0 0.0
  %382 = vmatpush1.msra.mxu0 %v356
  %383 = vmatprep.subr.mxu0 0.0
  %384 = vmatpush1.msra.mxu0 %v357
  %385 = vmatprep.subr.mxu0 0.0
  %386 = vmatpush1.msra.mxu0 %v358
  %387 = vmatprep.subr.mxu0 0.0
  %388 = vmatpush1.msra.mxu0 %v359
  %389 = vmatprep.subr.mxu0 0.0
  %390 = vmatpush1.msra.mxu0 %v360
  %391 = vmatprep.subr.mxu0 0.0
  %392 = vmatpush1.msra.mxu0 %v361
  %393 = vmatprep.subr.mxu0 0.0
  %394 = vmatpush1.msra.mxu0 %v362
  %395 = vmatprep.subr.mxu0 0.0
  %396 = vmatpush1.msra.mxu0 %v363
  %397 = vmatprep.subr.mxu0 0.0
  %398 = vmatpush1.msra.mxu0 %v364
  %399 = vmatprep.subr.mxu0 0.0
  %400 = vmatpush1.msra.mxu0 %v365
  %401 = vmatprep.subr.mxu0 0.0
  %402 = vmatpush1.msra.mxu0 %v366
  %403 = vmatprep.subr.mxu0 0.0
  %404 = vmatpush1.msra.mxu0 %v367
  %405 = vmatprep.subr.mxu0 0.0
  %406 = vmatpush1.msra.mxu0 %v368
  %407 = vmatprep.subr.mxu0 0.0
  %408 = vmatpush1.msra.mxu0 %v369
  %409 = vmatprep.subr.mxu0 0.0
  %410 = vmatpush1.msra.mxu0 0.0
  %411 = vmatprep.subr.mxu0 0.0
  %412 = vmatpush1.msra.mxu0 0.0
  %413 = vmatprep.subr.mxu0 0.0
  %414 = vmatpush1.msra.mxu0 0.0
  %415 = vmatprep.subr.mxu0 0.0
  %416 = vmatpush1.msra.mxu0 0.0
  %417 = vmatprep.subr.mxu0 0.0
  %418 = vmatpush1.msra.mxu0 0.0
  %419 = vmatprep.subr.mxu0 0.0
  %420 = vmatpush1.msra.mxu0 0.0
  %421 = vmatprep.subr.mxu0 0.0
  %422 = vmatpush1.msra.mxu0 0.0
  %423 = vmatprep.subr.mxu0 0.0
  %424 = vmatpush1.msra.mxu0 0.0
  %425 = vmatprep.subr.mxu0 0.0
  %426 = vmatpush1.msra.mxu0 0.0
  %427 = vmatprep.subr.mxu0 0.0
  %428 = vmatpush1.msra.mxu0 0.0
  %429 = vmatprep.subr.mxu0 0.0
  %430 = vmatpush1.msra.mxu0 0.0
  %431 = vmatprep.subr.mxu0 0.0
  %432 = vmatpush1.msra.mxu0 0.0
  %433 = vmatprep.subr.mxu0 0.0
  %434 = vmatpush1.msra.mxu0 0.0
  %435 = vmatprep.subr.mxu0 0.0
  %436 = vmatpush1.msra.mxu0 0.0
  %437 = vmatprep.subr.mxu0 0.0
  %438 = vmatpush1.msra.mxu0 0.0
  %439 = vmatprep.subr.mxu0 0.0
  %440 = vmatpush1.msra.mxu0 0.0
  %441 = vmatprep.mubr.f32.mxu0 0.0
  %442 = vmatmul.mubr.f32.gmra.mrb[0].mxu0 %v338
  %v443 = vpop.f32.mrb[0].mxu0
  %v444 = vadd.f32 %v375, %v443
  %v445 = vpop.f32.mrb[0].mxu0
  %446 = vmatprep.mubr.f32.mxu0 0.0
  %447 = vmatmul.mubr.f32.gmra.mrb[0].mxu0 %v339
  %v448 = vpop.f32.mrb[0].mxu0
  %v449 = vadd.f32 %v375, %v448
  %v450 = vpop.f32.mrb[0].mxu0
  %451 = vmatprep.mubr.f32.mxu0 0.0
  %452 = vmatmul.mubr.f32.gmra.mrb[0].mxu0 %v340
  %v453 = vpop.f32.mrb[0].mxu0
  %v454 = vadd.f32 %v375, %v453
  %v455 = vpop.f32.mrb[0].mxu0
  %456 = vmatprep.mubr.f32.mxu0 0.0
  %457 = vmatmul.mubr.f32.gmra.mrb[0].mxu0 %v341
  %v458 = vpop.f32.mrb[0].mxu0
  %v459 = vadd.f32 %v375, %v458
  %v460 = vpop.f32.mrb[0].mxu0
  %461 = vmatprep.mubr.f32.mxu0 0.0
  %462 = vmatmul.mubr.f32.gmra.mrb[0].mxu0 %v342
  %v463 = vpop.f32.mrb[0].mxu0
  %v464 = vadd.f32 %v375, %v463
  %v465 = vpop.f32.mrb[0].mxu0
  %466 = vmatprep.mubr.f32.mxu0 0.0
  %467 = vmatmul.mubr.f32.gmra.mrb[0].mxu0 %v343
  %v468 = vpop.f32.mrb[0].mxu0
  %v469 = vadd.f32 %v375, %v468
  %v470 = vpop.f32.mrb[0].mxu0
  %471 = vmatprep.mubr.f32.mxu0 0.0
  %472 = vmatmul.mubr.f32.gmra.mrb[0].mxu0 %v344
  %v473 = vpop.f32.mrb[0].mxu0
  %v474 = vadd.f32 %v375, %v473
  %v475 = vpop.f32.mrb[0].mxu0
  %476 = vmatprep.mubr.f32.mxu0 0.0
  %477 = vmatmul.mubr.f32.gmra.mrb[0].mxu0 %v345
  %v478 = vpop.f32.mrb[0].mxu0
  %v479 = vadd.f32 %v375, %v478
  %v480 = vpop.f32.mrb[0].mxu0
  %481 = vmatprep.mubr.f32.mxu0 0.0
  %482 = vmatmul.mubr.f32.gmra.mrb[0].mxu0 %v346
  %v483 = vpop.f32.mrb[0].mxu0
  %v484 = vadd.f32 %v375, %v483
  %v485 = vpop.f32.mrb[0].mxu0
  %486 = vmatprep.mubr.f32.mxu0 0.0
  %487 = vmatmul.mubr.f32.gmra.mrb[0].mxu0 %v347
  %v488 = vpop.f32.mrb[0].mxu0
  %v489 = vadd.f32 %v375, %v488
  %v490 = vpop.f32.mrb[0].mxu0
  %491 = vmatprep.mubr.f32.mxu0 0.0
  %492 = vmatmul.mubr.f32.gmra.mrb[0].mxu0 %v348
  %v493 = vpop.f32.mrb[0].mxu0
  %v494 = vadd.f32 %v375, %v493
  %v495 = vpop.f32.mrb[0].mxu0
  %496 = vmatprep.mubr.f32.mxu0 0.0
  %497 = vmatmul.mubr.f32.gmra.mrb[0].mxu0 %v349
  %v498 = vpop.f32.mrb[0].mxu0
  %v499 = vadd.f32 %v375, %v498
  %v500 = vpop.f32.mrb[0].mxu0
  %501 = vmatprep.mubr.f32.mxu0 0.0
  %502 = vmatmul.mubr.f32.gmra.mrb[0].mxu0 %v350
  %v503 = vpop.f32.mrb[0].mxu0
  %v504 = vadd.f32 %v375, %v503
  %v505 = vpop.f32.mrb[0].mxu0
  %506 = vmatprep.mubr.f32.mxu0 0.0
  %507 = vmatmul.mubr.f32.gmra.mrb[0].mxu0 %v351
  %v508 = vpop.f32.mrb[0].mxu0
  %v509 = vadd.f32 %v375, %v508
  %v510 = vpop.f32.mrb[0].mxu0
  %511 = vmatprep.mubr.f32.mxu0 0.0
  %512 = vmatmul.mubr.f32.gmra.mrb[0].mxu0 %v352
  %v513 = vpop.f32.mrb[0].mxu0
  %v514 = vadd.f32 %v375, %v513
  %v515 = vpop.f32.mrb[0].mxu0
  %516 = vmatprep.mubr.f32.mxu0 0.0
  %517 = vmatmul.mubr.f32.gmra.mrb[0].mxu0 %v353
  %v518 = vpop.f32.mrb[0].mxu0
  %v519 = vadd.f32 %v375, %v518
  %v520 = vpop.f32.mrb[0].mxu0
  %521 = vdwg.mxu0
  %v522 = vld [vmem:[%s8] sm:$0x1]
  %v523 = vadd.f32 %v444, %v449
  %v524 = vadd.f32 %v523, %v454
  %v525 = vadd.f32 %v524, %v459
  %v526 = vadd.f32 %v525, %v464
  %v527 = vadd.f32 %v526, %v469
  %v528 = vadd.f32 %v527, %v474
  %v529 = vadd.f32 %v528, %v479
  %v530 = vadd.f32 %v529, %v484
  %v531 = vadd.f32 %v530, %v489
  %v532 = vadd.f32 %v531, %v494
  %v533 = vadd.f32 %v532, %v499
  %v534 = vadd.f32 %v533, %v504
  %v535 = vadd.f32 %v534, %v509
  %v536 = vadd.f32 %v535, %v514
  %v537 = vadd.f32 %v536, %v519
  %v538 = vrot.slane %v537, 4
  %v539 = vadd.f32 %v537, %v538
  %v540 = vrot.slane %v539, 2
  %v541 = vadd.f32 %v539, %v540
  %v542 = vrot.slane %v541, 1
  %v543 = vadd.f32 %v541, %v542
  %v544 = vadd.f32 %v522, %v543
  %545 = vst [vmem:[%s8] sm:$0x1] %v544
  %v546 = vld [vmem:[%s9] sm:$0x1]
  %v547 = vmul.f32 %v444, %v444
  %v548 = vmul.f32 %v449, %v449
  %v549 = vmul.f32 %v454, %v454
  %v550 = vmul.f32 %v459, %v459
  %v551 = vmul.f32 %v464, %v464
  %v552 = vmul.f32 %v469, %v469
  %v553 = vmul.f32 %v474, %v474
  %v554 = vmul.f32 %v479, %v479
  %v555 = vmul.f32 %v484, %v484
  %v556 = vmul.f32 %v489, %v489
  %v557 = vmul.f32 %v494, %v494
  %v558 = vmul.f32 %v499, %v499
  %v559 = vmul.f32 %v504, %v504
  %v560 = vmul.f32 %v509, %v509
  %v561 = vmul.f32 %v514, %v514
  %v562 = vmul.f32 %v519, %v519
  %v563 = vadd.f32 %v547, %v548
  %v564 = vadd.f32 %v563, %v549
  %v565 = vadd.f32 %v564, %v550
  %v566 = vadd.f32 %v565, %v551
  %v567 = vadd.f32 %v566, %v552
  %v568 = vadd.f32 %v567, %v553
  %v569 = vadd.f32 %v568, %v554
  %v570 = vadd.f32 %v569, %v555
  %v571 = vadd.f32 %v570, %v556
  %v572 = vadd.f32 %v571, %v557
  %v573 = vadd.f32 %v572, %v558
  %v574 = vadd.f32 %v573, %v559
  %v575 = vadd.f32 %v574, %v560
  %v576 = vadd.f32 %v575, %v561
  %v577 = vadd.f32 %v576, %v562
  %v578 = vrot.slane %v577, 4
  %v579 = vadd.f32 %v577, %v578
  %v580 = vrot.slane %v579, 2
  %v581 = vadd.f32 %v579, %v580
  %v582 = vrot.slane %v581, 1
  %v583 = vadd.f32 %v581, %v582
  %v584 = vadd.f32 %v546, %v583
  %585 = vst [vmem:[%s9] sm:$0x1] %v584
  %v586 = vld [vmem:[%s7] sm:$0x1]
  %v588 = vlaneseq
  %v589 = vshrl.u32 %v588, 7
  %v590 = vsub.s32 0, %v589
  %v591 = vrot.slane %v586, %v590
  %v593 = vmul.f32 %v444, %v591
  %v594 = vmul.f32 %v449, %v591
  %v595 = vmul.f32 %v454, %v591
  %v596 = vmul.f32 %v459, %v591
  %v597 = vmul.f32 %v464, %v591
  %v598 = vmul.f32 %v469, %v591
  %v599 = vmul.f32 %v474, %v591
  %v600 = vmul.f32 %v479, %v591
  %v601 = vmul.f32 %v484, %v591
  %v602 = vmul.f32 %v489, %v591
  %v603 = vmul.f32 %v494, %v591
  %v604 = vmul.f32 %v499, %v591
  %v605 = vmul.f32 %v504, %v591
  %v606 = vmul.f32 %v509, %v591
  %v607 = vmul.f32 %v514, %v591
  %v608 = vmul.f32 %v519, %v591
  %v609 = vrot.slane %v593, 4
  %v610 = vmax.f32 %v593, %v609
  %v611 = vrot.slane %v610, 2
  %v612 = vmax.f32 %v610, %v611
  %v613 = vrot.slane %v612, 1
  %v614 = vmax.f32 %v612, %v613
  %v615 = vrot.slane %v594, 4
  %v616 = vmax.f32 %v594, %v615
  %v617 = vrot.slane %v616, 2
  %v618 = vmax.f32 %v616, %v617
  %v619 = vrot.slane %v618, 1
  %v620 = vmax.f32 %v618, %v619
  %v621 = vrot.slane %v595, 4
  %v622 = vmax.f32 %v595, %v621
  %v623 = vrot.slane %v622, 2
  %v624 = vmax.f32 %v622, %v623
  %v625 = vrot.slane %v624, 1
  %v626 = vmax.f32 %v624, %v625
  %v627 = vrot.slane %v596, 4
  %v628 = vmax.f32 %v596, %v627
  %v629 = vrot.slane %v628, 2
  %v630 = vmax.f32 %v628, %v629
  %v631 = vrot.slane %v630, 1
  %v632 = vmax.f32 %v630, %v631
  %v633 = vrot.slane %v597, 4
  %v634 = vmax.f32 %v597, %v633
  %v635 = vrot.slane %v634, 2
  %v636 = vmax.f32 %v634, %v635
  %v637 = vrot.slane %v636, 1
  %v638 = vmax.f32 %v636, %v637
  %v639 = vrot.slane %v598, 4
  %v640 = vmax.f32 %v598, %v639
  %v641 = vrot.slane %v640, 2
  %v642 = vmax.f32 %v640, %v641
  %v643 = vrot.slane %v642, 1
  %v644 = vmax.f32 %v642, %v643
  %v645 = vrot.slane %v599, 4
  %v646 = vmax.f32 %v599, %v645
  %v647 = vrot.slane %v646, 2
  %v648 = vmax.f32 %v646, %v647
  %v649 = vrot.slane %v648, 1
  %v650 = vmax.f32 %v648, %v649
  %v651 = vrot.slane %v600, 4
  %v652 = vmax.f32 %v600, %v651
  %v653 = vrot.slane %v652, 2
  %v654 = vmax.f32 %v652, %v653
  %v655 = vrot.slane %v654, 1
  %v656 = vmax.f32 %v654, %v655
  %v657 = vrot.slane %v601, 4
  %v658 = vmax.f32 %v601, %v657
  %v659 = vrot.slane %v658, 2
  %v660 = vmax.f32 %v658, %v659
  %v661 = vrot.slane %v660, 1
  %v662 = vmax.f32 %v660, %v661
  %v663 = vrot.slane %v602, 4
  %v664 = vmax.f32 %v602, %v663
  %v665 = vrot.slane %v664, 2
  %v666 = vmax.f32 %v664, %v665
  %v667 = vrot.slane %v666, 1
  %v668 = vmax.f32 %v666, %v667
  %v669 = vrot.slane %v603, 4
  %v670 = vmax.f32 %v603, %v669
  %v671 = vrot.slane %v670, 2
  %v672 = vmax.f32 %v670, %v671
  %v673 = vrot.slane %v672, 1
  %v674 = vmax.f32 %v672, %v673
  %v675 = vrot.slane %v604, 4
  %v676 = vmax.f32 %v604, %v675
  %v677 = vrot.slane %v676, 2
  %v678 = vmax.f32 %v676, %v677
  %v679 = vrot.slane %v678, 1
  %v680 = vmax.f32 %v678, %v679
  %v681 = vrot.slane %v605, 4
  %v682 = vmax.f32 %v605, %v681
  %v683 = vrot.slane %v682, 2
  %v684 = vmax.f32 %v682, %v683
  %v685 = vrot.slane %v684, 1
  %v686 = vmax.f32 %v684, %v685
  %v687 = vrot.slane %v606, 4
  %v688 = vmax.f32 %v606, %v687
  %v689 = vrot.slane %v688, 2
  %v690 = vmax.f32 %v688, %v689
  %v691 = vrot.slane %v690, 1
  %v692 = vmax.f32 %v690, %v691
  %v693 = vrot.slane %v607, 4
  %v694 = vmax.f32 %v607, %v693
  %v695 = vrot.slane %v694, 2
  %v696 = vmax.f32 %v694, %v695
  %v697 = vrot.slane %v696, 1
  %v698 = vmax.f32 %v696, %v697
  %v699 = vrot.slane %v608, 4
  %v700 = vmax.f32 %v608, %v699
  %v701 = vrot.slane %v700, 2
  %v702 = vmax.f32 %v700, %v701
  %v703 = vrot.slane %v702, 1
  %v704 = vmax.f32 %v702, %v703
  %vm721 = vcmask 1041409
  %v722 = vsel %vm721, %v620, %v614
  %vm723 = vcmask 1042434
  %v724 = vsel %vm723, %v626, %v722
  %vm725 = vcmask 1043459
  %v726 = vsel %vm725, %v632, %v724
  %vm727 = vcmask 1044484
  %v728 = vsel %vm727, %v638, %v726
  %vm729 = vcmask 1045509
  %v730 = vsel %vm729, %v644, %v728
  %vm731 = vcmask 1046534
  %v732 = vsel %vm731, %v650, %v730
  %vm733 = vcmask 1047559
  %v734 = vsel %vm733, %v656, %v732
  %v735 = vsel %vm721, %v668, %v662
  %v736 = vsel %vm723, %v674, %v735
  %v737 = vsel %vm725, %v680, %v736
  %v738 = vsel %vm727, %v686, %v737
  %v739 = vsel %vm729, %v692, %v738
  %v740 = vsel %vm731, %v698, %v739
  %v741 = vsel %vm733, %v704, %v740
  %744 = vst [vmem:[%s65] sm:$0xff] %v734
  %745 = vst [vmem:[%s65 + $0x8] sm:$0xff] %v741
  %s746 = sadd.s32 0, 0
  %s747 = smul.u32 2, %s746
  %p748 = scmp.lt.s32.totalorder %s747, 1
  %s749 = scalar_select %p748, %s747, 1
  %s750 = smul.addr %s749, 8
  %s751 = scalar_lea.vmem %s10, %s750
  // Predicated region
  $region38: #{pointnet_set_abstraction.3} parent=0 // pred_check
    _
  $region39: #{pointnet_set_abstraction.3} parent=0 // pred_check_branch
    %753 = sbr.rel (0) target = $region41
  $region40: #{pointnet_set_abstraction.3} parent=0 // pred_region
    _
  $region41: #{pointnet_set_abstraction.3} parent=0 // pred_fallthru
    _
  // Predicated region
  $region42: #{pointnet_set_abstraction.3} parent=0 // pred_check
    _
  $region43: #{pointnet_set_abstraction.3} parent=0 // pred_check_branch
    %755 = sbr.rel (0) target = $region45
  $region44: #{pointnet_set_abstraction.3} parent=0 // pred_region
    _
  $region45: #{pointnet_set_abstraction.3} parent=0 // pred_fallthru
    _
  // Predicated region
  $region46: #{pointnet_set_abstraction.3} parent=0 // pred_check
    _
  $region47: #{pointnet_set_abstraction.3} parent=0 // pred_check_branch
    %757 = sbr.rel (0) target = $region49
  $region48: #{pointnet_set_abstraction.3} parent=0 // pred_region
    %s758 = sadd.s32 0, 0
    %s759 = smul.u32 2, %s758
  $region49: #{pointnet_set_abstraction.3} parent=0 // pred_fallthru
    _
  // Predicated region
  $region50: #{pointnet_set_abstraction.3} parent=0 // pred_check
    _
  $region51: #{pointnet_set_abstraction.3} parent=0 // pred_check_branch
    %761 = sbr.rel (0) target = $region53
  $region52: #{pointnet_set_abstraction.3} parent=0 // pred_region
    _
  $region53: #{pointnet_set_abstraction.3} parent=0 // pred_fallthru
    _
  // Predicated region
  $region54: #{pointnet_set_abstraction.3} parent=0 // pred_check
    _
  $region55: #{pointnet_set_abstraction.3} parent=0 // pred_check_branch
    %763 = sbr.rel (0) target = $region57
  $region56: #{pointnet_set_abstraction.3} parent=0 // pred_region
    _
  $region57: #{pointnet_set_abstraction.3} parent=0 // pred_fallthru
    _
  // Predicated region
  $region58: #{pointnet_set_abstraction.3} parent=0 // pred_check
    _
  $region59: #{pointnet_set_abstraction.3} parent=0 // pred_check_branch
    %765 = sbr.rel (0) target = $region61
  $region60: #{pointnet_set_abstraction.3} parent=0 // pred_region
    %s766 = sadd.s32 0, 0
    %s767 = smul.u32 2, %s766
    %p768 = scmp.lt.s32.totalorder %s767, 1
    %s769 = scalar_select %p768, %s767, 1
    %s770 = smul.addr %s769, 8
    %s771 = scalar_lea.vmem %s10, %s770
  $region61: #{pointnet_set_abstraction.3} parent=0 // pred_fallthru
    _

</llo_original>
